<compile_context>
chip_gen: v5e
topology: v5e:2x2
jax: 0.10.0
libtpu: 0.0.40
codegen_flags: <defaults>
</compile_context>

<pallas_src>
import math
import functools

import jax
import jax.numpy as jnp
from jax import lax
from jax.experimental import pallas as pl
from jax.experimental.pallas import tpu as pltpu


# ---------------------------------------------------------------------------
# In-kernel helpers
# ---------------------------------------------------------------------------
def _layernorm(x, gamma, beta, eps):
    """LayerNorm over the last axis, f32 math (torch eps-inside-sqrt semantics)."""
    mu = jnp.mean(x, axis=-1, keepdims=True)
    xc = x - mu
    var = jnp.mean(xc * xc, axis=-1, keepdims=True)
    inv = lax.rsqrt(var + eps)
    return xc * inv * gamma.astype(jnp.float32) + beta.astype(jnp.float32)


# ---------------------------------------------------------------------------
# Fused TransformerEncoderLayer kernel (self-attention + FFN + LayerNorms)
# ---------------------------------------------------------------------------
def _encoder_layer_kernel(*refs, nhead, head_dim, eps, with_attn, do_final_norm):
    n_in = 17 + (2 if do_final_norm else 0)
    n_out = 1 + (1 if with_attn else 0)
    in_refs = refs[:n_in]
    out_refs = refs[n_in:n_in + n_out]
    ctx_ref = refs[n_in + n_out]           # (rows, E) VMEM scratch, head-major ctx

    (x_ref, wq_ref, wk_ref, wv_ref, bq_ref, bk_ref, bv_ref,
     wo_ref, bo_ref, g1_ref, be1_ref,
     w1_ref, b1_ref, w2_ref, b2_ref, g2_ref, be2_ref, *extra) = in_refs
    if do_final_norm:
        gn_ref, bn_ref = extra
    out_ref = out_refs[0]
    attn_ref = out_refs[1] if with_attn else None

    bb, L, E = x_ref.shape
    S = L                        # self-attention: query = key = value = src
    rows = bb * L
    mxu_dt = wq_ref.dtype        # MXU operand dtype (bf16 weights => bf16 operands)

    x = x_ref[...]
    x2 = x.reshape(rows, E)
    xm = x2.astype(mxu_dt)

    # Lane-dense fused projections (N = E); 1/sqrt(head_dim) folded into wq/bq.
    q = (jnp.dot(xm, wq_ref[...], preferred_element_type=jnp.float32)
         + bq_ref[...].astype(jnp.float32))
    k = (jnp.dot(xm, wk_ref[...], preferred_element_type=jnp.float32)
         + bk_ref[...].astype(jnp.float32))
    v = (jnp.dot(xm, wv_ref[...], preferred_element_type=jnp.float32)
         + bv_ref[...].astype(jnp.float32))
    q3 = q.reshape(bb, L, E).astype(mxu_dt)
    k3 = k.reshape(bb, S, E).astype(mxu_dt)
    v3 = v.reshape(bb, S, E).astype(mxu_dt)

    # Attention core per head; ctx collected head-major into the VMEM scratch so the
    # output projection is a single K=E GEMM after the loop.  Head-averaged attention
    # weights are accumulated directly in the attn output ref (no big live carry).
    for h in range(nhead):
        lo = h * head_dim
        qh = q3[:, :, lo:lo + head_dim]
        kh = k3[:, :, lo:lo + head_dim]
        s = jnp.einsum("bld,bsd->bls", qh, kh,
                       preferred_element_type=jnp.float32)          # (bb, L, S)
        m = jnp.max(s, axis=-1, keepdims=True)
        p = jnp.exp(s - m)
        p = p * pl.reciprocal(jnp.sum(p, axis=-1, keepdims=True), approx=True)

        vh = v3[:, :, lo:lo + head_dim]
        ctx_h = jnp.einsum("bls,bsd->bld", p.astype(mxu_dt), vh,
                           preferred_element_type=jnp.float32)       # (bb, L, Dh)
        ctx_ref[:, lo:lo + head_dim] = ctx_h.reshape(rows, head_dim).astype(ctx_ref.dtype)

        if with_attn:
            if h == 0:
                attn_ref[...] = p.astype(attn_ref.dtype)
            else:
                attn_ref[...] += p.astype(attn_ref.dtype)

    if with_attn:
        attn_ref[...] = (attn_ref[...] * (1.0 / nhead)).astype(attn_ref.dtype)

    # Output projection: one K = E GEMM.
    attn_out = (jnp.dot(ctx_ref[...], wo_ref[...], preferred_element_type=jnp.float32)
                + bo_ref[...].astype(jnp.float32))

    # Residual + LayerNorm1 (normalize_before=False path).
    h1 = _layernorm(x2.astype(jnp.float32) + attn_out, g1_ref[...], be1_ref[...], eps)

    # Position-wise FFN: Linear -> ReLU -> Linear (dropout = 0).
    f = (jnp.dot(h1.astype(mxu_dt), w1_ref[...], preferred_element_type=jnp.float32)
         + b1_ref[...].astype(jnp.float32))
    f = jnp.maximum(f, 0.0)
    f = (jnp.dot(f.astype(mxu_dt), w2_ref[...], preferred_element_type=jnp.float32)
         + b2_ref[...].astype(jnp.float32))

    # Residual + LayerNorm2 (+ optional fused encoder-final LayerNorm).
    y = _layernorm(h1 + f, g2_ref[...], be2_ref[...], eps)
    if do_final_norm:
        y = _layernorm(y, gn_ref[...], bn_ref[...], eps)

    out_ref[...] = y.reshape(bb, L, E).astype(out_ref.dtype)


def _const_spec(shape):
    """Spec for a grid-invariant (weight/bias) input: constant index_map, single buffer."""
    zeros = (0,) * len(shape)
    return pl.BlockSpec(shape, lambda *_: zeros, pipeline_mode=pl.Buffered(1))


def _encoder_layer(x, p, *, nhead, head_dim, eps, block_b, with_attn,
                   final_norm=None, vmem_limit_bytes=None):
    B, L, E = x.shape
    S = L
    F = p["w1"].shape[1]
    do_final_norm = final_norm is not None
    mxu_dt = p["wo"].dtype

    in_specs = [
        pl.BlockSpec((block_b, L, E), lambda b: (b, 0, 0)),          # x
        _const_spec((E, E)), _const_spec((E, E)), _const_spec((E, E)),   # wq wk wv
        _const_spec((1, E)), _const_spec((1, E)), _const_spec((1, E)),   # bq bk bv
        _const_spec((E, E)), _const_spec((1, E)),                        # wo bo
        _const_spec((1, E)), _const_spec((1, E)),                        # ln1 gamma/beta
        _const_spec((E, F)), _const_spec((1, F)),                        # ffn W1/b1
        _const_spec((F, E)), _const_spec((1, E)),                        # ffn W2/b2
        _const_spec((1, E)), _const_spec((1, E)),                        # ln2 gamma/beta
    ]
    args = [x, p["wq"], p["wk"], p["wv"], p["bq"], p["bk"], p["bv"],
            p["wo"], p["bo"], p["g1"], p["be1"],
            p["w1"], p["b1"], p["w2"], p["b2"], p["g2"], p["be2"]]
    if do_final_norm:
        gn, bn = final_norm
        in_specs += [_const_spec((1, E)), _const_spec((1, E))]
        args += [gn, bn]

    out_shape = [jax.ShapeDtypeStruct((B, L, E), x.dtype)]
    out_specs = [pl.BlockSpec((block_b, L, E), lambda b: (b, 0, 0))]
    if with_attn:
        # TODO(synk): could be emitted bf16 on v7x to halve the writeback.
        out_shape.append(jax.ShapeDtypeStruct((B, L, S), jnp.float32))
        out_specs.append(pl.BlockSpec((block_b, L, S), lambda b: (b, 0, 0)))

    kernel = functools.partial(_encoder_layer_kernel, nhead=nhead, head_dim=head_dim,
                               eps=eps, with_attn=with_attn, do_final_norm=do_final_norm)
    compiler_kwargs = dict(dimension_semantics=("parallel",))
    if vmem_limit_bytes is not None:
        compiler_kwargs["vmem_limit_bytes"] = int(vmem_limit_bytes)

    res = pl.pallas_call(
        kernel,
        out_shape=tuple(out_shape),
        grid_spec=pltpu.PrefetchScalarGridSpec(
            num_scalar_prefetch=0,
            grid=(B // block_b,),
            in_specs=in_specs,
            out_specs=tuple(out_specs),
            scratch_shapes=[pltpu.VMEM((block_b * L, E), mxu_dt)]),
        compiler_params=pltpu.CompilerParams(**compiler_kwargs),
    )(*args)

    if with_attn:
        out, attn = res
        return out, attn
    out = res[0] if isinstance(res, (tuple, list)) else res
    return out, None


# ---------------------------------------------------------------------------
# Standalone LayerNorm kernel (only used in the degenerate zero-layer case)
# ---------------------------------------------------------------------------
def _layernorm_kernel(x_ref, g_ref, b_ref, out_ref, *, eps):
    x = x_ref[...].astype(jnp.float32)
    out_ref[...] = _layernorm(x, g_ref[...], b_ref[...], eps).astype(out_ref.dtype)


def _layernorm_call(x, g, b, *, eps, block_b):
    B, L, E = x.shape
    return pl.pallas_call(
        functools.partial(_layernorm_kernel, eps=eps),
        out_shape=jax.ShapeDtypeStruct((B, L, E), x.dtype),
        grid_spec=pltpu.PrefetchScalarGridSpec(
            num_scalar_prefetch=0,
            grid=(B // block_b,),
            in_specs=[pl.BlockSpec((block_b, L, E), lambda i: (i, 0, 0)),
                      _const_spec((1, E)), _const_spec((1, E))],
            out_specs=pl.BlockSpec((block_b, L, E), lambda i: (i, 0, 0))),
        compiler_params=pltpu.CompilerParams(dimension_semantics=("parallel",)),
    )(x, g, b)


# ---------------------------------------------------------------------------
# VMEM budgeting / block_b selection (generation-aware)
# ---------------------------------------------------------------------------
def _tpu_vmem_capacity():
    try:
        return int(pltpu.get_tpu_info().vmem_capacity_bytes)
    except Exception:
        return 64 << 20          # conservative (v7x per-TC physical VMEM)


def _layer_vmem_bytes(block_b, L, E, F, x_bytes, w_bytes, with_attn, mxu_bytes):
    rows = block_b * L
    S = L
    n = 0
    n += 2 * block_b * L * E * x_bytes            # input x (double-buffered)
    n += 2 * block_b * L * E * x_bytes            # output (double-buffered)
    if with_attn:
        n += 2 * block_b * L * S * 4              # attn output (f32)
    n += w_bytes                                   # single-buffered weights/biases
    n += rows * E * mxu_bytes                      # ctx scratch
    # transient intermediates: q/k/v/h1 (rows,E f32), ffn hidden, per-head score/prob
    n += 4 * rows * E * 4 + rows * F * 4 + 2 * block_b * L * S * 4
    return n


def _weight_bytes(p, with_final_norm, E):
    n = sum(int(v.size) * int(v.dtype.itemsize) for v in p.values())
    if with_final_norm:
        n += 2 * E * 4
    return n


def _pick_block_b(B, L, E, F, x_bytes, w_bytes, with_attn, mxu_bytes, cap):
    divisors = [d for d in range(1, B + 1) if B % d == 0]
    fits = [d for d in divisors
            if _layer_vmem_bytes(d, L, E, F, x_bytes, w_bytes, with_attn, mxu_bytes)
            <= int(0.75 * cap)]
    if not fits:
        fits = [1]
    # Keep at least 2 grid steps so the "parallel" axis can span both v7x TensorCores.
    multi = [d for d in fits if B // d >= 2]
    return max(multi) if multi else max(fits)


# ---------------------------------------------------------------------------
# TransformerEncoder wrapper
# ---------------------------------------------------------------------------
def transformer_encoder(src, layer_params, norm_params, *, nhead,
                        eps=1e-6, block_b=None, return_attn_weights=True):
    """src: (B, L, E). Returns (output (B,L,E), [attn (B,L,L)] per layer)."""
    B, L, E = src.shape
    assert E % nhead == 0
    head_dim = E // nhead
    cap = _tpu_vmem_capacity()
    x_bytes = int(src.dtype.itemsize)

    if layer_params:
        F = layer_params[0]["w1"].shape[1]
        mxu_bytes = int(layer_params[0]["wo"].dtype.itemsize)
        w_bytes = max(_weight_bytes(p, True, E) for p in layer_params)
    else:
        F, mxu_bytes, w_bytes = E, 4, 0

    if block_b is None:
        block_b = _pick_block_b(B, L, E, F, x_bytes, w_bytes,
                                return_attn_weights, mxu_bytes, cap)
    assert B % block_b == 0, (B, block_b)

    budget = _layer_vmem_bytes(block_b, L, E, F, x_bytes, w_bytes,
                               return_attn_weights, mxu_bytes)
    vmem_limit = int(min(max(budget * 3 // 2, 16 << 20), int(0.9 * cap)))

    gn, bn = norm_params
    out = src
    attn_list = []
    n_layers = len(layer_params)
    for i, p in enumerate(layer_params):
        is_last = (i == n_layers - 1)
        out, attn = _encoder_layer(out, p, nhead=nhead, head_dim=head_dim, eps=eps,
                                   block_b=block_b, with_attn=return_attn_weights,
                                   final_norm=(gn, bn) if is_last else None,
                                   vmem_limit_bytes=vmem_limit)
        if return_attn_weights:
            attn_list.append(attn)

    if not layer_params:                      # degenerate case: only the final norm
        out = _layernorm_call(out, gn, bn, eps=eps, block_b=block_b)

    if return_attn_weights:
        return out, attn_list
    return out


# ---------------------------------------------------------------------------
# Parameter preparation (torch layout -> x@W layout, scale folded, optional bf16)
# ---------------------------------------------------------------------------
def prepare_layer_params(torch_layer, *, nhead, dtype=jnp.float32):
    (in_w, in_b, out_w, out_b, g1, b1, w1, bb1, w2, bb2, g2, b2) = torch_layer
    E = out_w.shape[0]
    dh = E // nhead
    scale = 1.0 / math.sqrt(dh)
    cast = lambda a: jnp.asarray(a, dtype)

    return dict(
        wq=cast(in_w[:E].T * scale),
        wk=cast(in_w[E:2 * E].T),
        wv=cast(in_w[2 * E:].T),
        bq=cast((in_b[:E] * scale).reshape(1, E)),
        bk=cast(in_b[E:2 * E].reshape(1, E)),
        bv=cast(in_b[2 * E:].reshape(1, E)),
        wo=cast(out_w.T),
        bo=cast(out_b.reshape(1, E)),
        g1=cast(g1.reshape(1, E)), be1=cast(b1.reshape(1, E)),
        w1=cast(w1.T), b1=cast(bb1.reshape(1, -1)),
        w2=cast(w2.T), b2=cast(bb2.reshape(1, E)),
        g2=cast(g2.reshape(1, E)), be2=cast(b2.reshape(1, E)),
    )


# ---------------------------------------------------------------------------
# Pure-JAX reference mirroring the PyTorch module (dropout=0, no masks)
# ---------------------------------------------------------------------------
def _layernorm_ref(x, g, b, eps):
    mu = x.mean(axis=-1, keepdims=True)
    var = ((x - mu) ** 2).mean(axis=-1, keepdims=True)
    return (x - mu) / jnp.sqrt(var + eps) * g + b


def _reference(src, torch_layers, norm, *, nhead, eps=1e-6):
    B, L, E = src.shape
    dh = E // nhead
    x = src.astype(jnp.float32)
    attns = []
    for (in_w, in_b, out_w, out_b, g1, b1, w1, bb1, w2, bb2, g2, b2) in torch_layers:
        q = x @ in_w[:E].T + in_b[:E]
        k = x @ in_w[E:2 * E].T + in_b[E:2 * E]
        v = x @ in_w[2 * E:].T + in_b[2 * E:]
        q = q.reshape(B, L, nhead, dh) / math.sqrt(dh)
        k = k.reshape(B, L, nhead, dh)
        v = v.reshape(B, L, nhead, dh)
        s = jnp.einsum("blhd,bshd->bhls", q, k)
        p = jax.nn.softmax(s, axis=-1)
        ctx = jnp.einsum("bhls,bshd->blhd", p, v).reshape(B, L, E)
        att_out = ctx @ out_w.T + out_b
        attns.append(p.mean(axis=1))
        x = _layernorm_ref(x + att_out, g1, b1, eps)
        ff = jax.nn.relu(x @ w1.T + bb1) @ w2.T + bb2
        x = _layernorm_ref(x + ff, g2, b2, eps)
    g_norm, b_norm = norm
    x = _layernorm_ref(x, g_norm, b_norm, eps)
    return x, attns


if __name__ == "__main__":
    B, L, E, NHEAD, D_FFN, NUM_LAYERS = 2, 16, 32, 4, 64, 2
    EPS = 1e-6

    root = jax.random.PRNGKey(0)
    k_src, k_params = jax.random.split(root)
    src = jax.random.normal(k_src, (B, L, E), jnp.float32)

    def uniform(key, shape, fan_in):
        bound = 1.0 / math.sqrt(fan_in)
        return jax.random.uniform(key, shape, jnp.float32, -bound, bound)

    torch_layers = []
    keys = jax.random.split(k_params, NUM_LAYERS + 1)
    for i in range(NUM_LAYERS):
        ks = jax.random.split(keys[i], 12)
        in_w = uniform(ks[0], (3 * E, E), E)
        in_b = uniform(ks[1], (3 * E,), E)
        out_w = uniform(ks[2], (E, E), E)
        out_b = uniform(ks[3], (E,), E)
        g1 = 1.0 + 0.1 * jax.random.normal(ks[4], (E,), jnp.float32)
        b1 = 0.1 * jax.random.normal(ks[5], (E,), jnp.float32)
        w1 = uniform(ks[6], (D_FFN, E), E)
        bb1 = uniform(ks[7], (D_FFN,), E)
        w2 = uniform(ks[8], (E, D_FFN), D_FFN)
        bb2 = uniform(ks[9], (E,), D_FFN)
        g2 = 1.0 + 0.1 * jax.random.normal(ks[10], (E,), jnp.float32)
        b2 = 0.1 * jax.random.normal(ks[11], (E,), jnp.float32)
        torch_layers.append((in_w, in_b, out_w, out_b, g1, b1,
                             w1, bb1, w2, bb2, g2, b2))
    kn = jax.random.split(keys[-1], 2)
    norm_g = 1.0 + 0.1 * jax.random.normal(kn[0], (E,), jnp.float32)
    norm_b = 0.1 * jax.random.normal(kn[1], (E,), jnp.float32)

    layer_params = [prepare_layer_params(lp, nhead=NHEAD) for lp in torch_layers]
    norm_params = (norm_g.reshape(1, E), norm_b.reshape(1, E))

    out, attns = transformer_encoder(src, layer_params, norm_params,
                                     nhead=NHEAD, eps=EPS,
                                     return_attn_weights=True)
    out = jax.block_until_ready(out)
    attns = [jax.block_until_ready(a) for a in attns]

    ref_out, ref_attns = _reference(src, torch_layers, (norm_g, norm_b),
                                    nhead=NHEAD, eps=EPS)

    assert out.shape == (B, L, E)
    assert len(attns) == NUM_LAYERS and all(a.shape == (B, L, L) for a in attns)
    assert jnp.allclose(out, ref_out, atol=2e-3, rtol=2e-3), \
        float(jnp.max(jnp.abs(out - ref_out)))
    for a, ra in zip(attns, ref_attns):
        assert jnp.allclose(a, ra, atol=2e-3, rtol=2e-3), \
            float(jnp.max(jnp.abs(a - ra)))

    # need_weights=False fast path (skips the (B, L, S) HBM writeback entirely).
    out_nw = transformer_encoder(src, layer_params, norm_params,
                                 nhead=NHEAD, eps=EPS,
                                 return_attn_weights=False)
    out_nw = jax.block_until_ready(out_nw)
    assert jnp.allclose(out_nw, out, atol=1e-5, rtol=1e-5)

    # bf16-weight fast path (bf16 MXU operands, f32 accumulation / elementwise math).
    layer_params_bf16 = [prepare_layer_params(lp, nhead=NHEAD, dtype=jnp.bfloat16)
                         for lp in torch_layers]
    out_bf16, _ = transformer_encoder(src, layer_params_bf16, norm_params,
                                      nhead=NHEAD, eps=EPS,
                                      return_attn_weights=True)
    out_bf16 = jax.block_until_ready(out_bf16)
    assert float(jnp.max(jnp.abs(out_bf16.astype(jnp.float32) - ref_out))) < 0.15

    print("KERNEL_OK")
</pallas_src>

<mosaic_0001>
module attributes {stable_mosaic.version = 11 : i64} {
  func.func @_encoder_layer_kernel(%arg0: i32, %arg1: memref<1x16x32xf32, #tpu.memory_space<vmem>>, %arg2: memref<32x32xf32, #tpu.memory_space<vmem>>, %arg3: memref<32x32xf32, #tpu.memory_space<vmem>>, %arg4: memref<32x32xf32, #tpu.memory_space<vmem>>, %arg5: memref<1x32xf32, #tpu.memory_space<vmem>>, %arg6: memref<1x32xf32, #tpu.memory_space<vmem>>, %arg7: memref<1x32xf32, #tpu.memory_space<vmem>>, %arg8: memref<32x32xf32, #tpu.memory_space<vmem>>, %arg9: memref<1x32xf32, #tpu.memory_space<vmem>>, %arg10: memref<1x32xf32, #tpu.memory_space<vmem>>, %arg11: memref<1x32xf32, #tpu.memory_space<vmem>>, %arg12: memref<32x64xf32, #tpu.memory_space<vmem>>, %arg13: memref<1x64xf32, #tpu.memory_space<vmem>>, %arg14: memref<64x32xf32, #tpu.memory_space<vmem>>, %arg15: memref<1x32xf32, #tpu.memory_space<vmem>>, %arg16: memref<1x32xf32, #tpu.memory_space<vmem>>, %arg17: memref<1x32xf32, #tpu.memory_space<vmem>>, %arg18: memref<1x16x32xf32, #tpu.memory_space<vmem>>, %arg19: memref<1x16x16xf32, #tpu.memory_space<vmem>>, %arg20: memref<16x32xf32, #tpu.memory_space<vmem>>) attributes {dimension_semantics = [#tpu.dimension_semantics<parallel>], iteration_bounds = array<i64: 2>, scalar_prefetch = 0 : i64, scratch_operands = 1 : i64, tpu.core_type = #tpu.core_type<tc>, window_params = [{transform_indices = @transform_0, window_bounds = array<i64: 1, 16, 32>}, {pipeline_mode = #tpu.pipeline_mode<synchronous>, transform_indices = @transform_1, window_bounds = array<i64: 32, 32>}, {pipeline_mode = #tpu.pipeline_mode<synchronous>, transform_indices = @transform_2, window_bounds = array<i64: 32, 32>}, {pipeline_mode = #tpu.pipeline_mode<synchronous>, transform_indices = @transform_3, window_bounds = array<i64: 32, 32>}, {pipeline_mode = #tpu.pipeline_mode<synchronous>, transform_indices = @transform_4, window_bounds = array<i64: 1, 32>}, {pipeline_mode = #tpu.pipeline_mode<synchronous>, transform_indices = @transform_5, window_bounds = array<i64: 1, 32>}, {pipeline_mode = #tpu.pipeline_mode<synchronous>, transform_indices = @transform_6, window_bounds = array<i64: 1, 32>}, {pipeline_mode = #tpu.pipeline_mode<synchronous>, transform_indices = @transform_7, window_bounds = array<i64: 32, 32>}, {pipeline_mode = #tpu.pipeline_mode<synchronous>, transform_indices = @transform_8, window_bounds = array<i64: 1, 32>}, {pipeline_mode = #tpu.pipeline_mode<synchronous>, transform_indices = @transform_9, window_bounds = array<i64: 1, 32>}, {pipeline_mode = #tpu.pipeline_mode<synchronous>, transform_indices = @transform_10, window_bounds = array<i64: 1, 32>}, {pipeline_mode = #tpu.pipeline_mode<synchronous>, transform_indices = @transform_11, window_bounds = array<i64: 32, 64>}, {pipeline_mode = #tpu.pipeline_mode<synchronous>, transform_indices = @transform_12, window_bounds = array<i64: 1, 64>}, {pipeline_mode = #tpu.pipeline_mode<synchronous>, transform_indices = @transform_13, window_bounds = array<i64: 64, 32>}, {pipeline_mode = #tpu.pipeline_mode<synchronous>, transform_indices = @transform_14, window_bounds = array<i64: 1, 32>}, {pipeline_mode = #tpu.pipeline_mode<synchronous>, transform_indices = @transform_15, window_bounds = array<i64: 1, 32>}, {pipeline_mode = #tpu.pipeline_mode<synchronous>, transform_indices = @transform_16, window_bounds = array<i64: 1, 32>}, {transform_indices = @transform_17, window_bounds = array<i64: 1, 16, 32>}, {transform_indices = @transform_18, window_bounds = array<i64: 1, 16, 16>}]} {
    %c0 = arith.constant 0 : index
    %c0_0 = arith.constant 0 : index
    %c0_1 = arith.constant 0 : index
    %0 = vector.load %arg1[%c0, %c0_0, %c0_1] : memref<1x16x32xf32, #tpu.memory_space<vmem>>, vector<1x16x32xf32>
    %1 = vector.shape_cast %0 : vector<1x16x32xf32> to vector<16x32xf32>
    %c0_2 = arith.constant 0 : index
    %c0_3 = arith.constant 0 : index
    %2 = vector.load %arg2[%c0_2, %c0_3] : memref<32x32xf32, #tpu.memory_space<vmem>>, vector<32x32xf32>
    %cst = arith.constant dense<0.000000e+00> : vector<16x32xf32>
    %3 = tpu.matmul %1, %2, %cst {dimension_numbers = #tpu.dot_dimension_numbers<[1], [0], [0], [1], [0, 0, 1, 1], [], []>} : vector<16x32xf32>, vector<32x32xf32>, vector<16x32xf32> -> vector<16x32xf32>
    %c0_4 = arith.constant 0 : index
    %c0_5 = arith.constant 0 : index
    %4 = vector.load %arg5[%c0_4, %c0_5] : memref<1x32xf32, #tpu.memory_space<vmem>>, vector<1x32xf32>
    %5 = vector.broadcast %4 : vector<1x32xf32> to vector<16x32xf32>
    %6 = arith.addf %3, %5 : vector<16x32xf32>
    %c0_6 = arith.constant 0 : index
    %c0_7 = arith.constant 0 : index
    %7 = vector.load %arg3[%c0_6, %c0_7] : memref<32x32xf32, #tpu.memory_space<vmem>>, vector<32x32xf32>
    %cst_8 = arith.constant dense<0.000000e+00> : vector<16x32xf32>
    %8 = tpu.matmul %1, %7, %cst_8 {dimension_numbers = #tpu.dot_dimension_numbers<[1], [0], [0], [1], [0, 0, 1, 1], [], []>} : vector<16x32xf32>, vector<32x32xf32>, vector<16x32xf32> -> vector<16x32xf32>
    %c0_9 = arith.constant 0 : index
    %c0_10 = arith.constant 0 : index
    %9 = vector.load %arg6[%c0_9, %c0_10] : memref<1x32xf32, #tpu.memory_space<vmem>>, vector<1x32xf32>
    %10 = vector.broadcast %9 : vector<1x32xf32> to vector<16x32xf32>
    %11 = arith.addf %8, %10 : vector<16x32xf32>
    %c0_11 = arith.constant 0 : index
    %c0_12 = arith.constant 0 : index
    %12 = vector.load %arg4[%c0_11, %c0_12] : memref<32x32xf32, #tpu.memory_space<vmem>>, vector<32x32xf32>
    %cst_13 = arith.constant dense<0.000000e+00> : vector<16x32xf32>
    %13 = tpu.matmul %1, %12, %cst_13 {dimension_numbers = #tpu.dot_dimension_numbers<[1], [0], [0], [1], [0, 0, 1, 1], [], []>} : vector<16x32xf32>, vector<32x32xf32>, vector<16x32xf32> -> vector<16x32xf32>
    %c0_14 = arith.constant 0 : index
    %c0_15 = arith.constant 0 : index
    %14 = vector.load %arg7[%c0_14, %c0_15] : memref<1x32xf32, #tpu.memory_space<vmem>>, vector<1x32xf32>
    %15 = vector.broadcast %14 : vector<1x32xf32> to vector<16x32xf32>
    %16 = arith.addf %13, %15 : vector<16x32xf32>
    %17 = vector.shape_cast %6 : vector<16x32xf32> to vector<1x16x32xf32>
    %18 = vector.shape_cast %11 : vector<16x32xf32> to vector<1x16x32xf32>
    %19 = vector.shape_cast %16 : vector<16x32xf32> to vector<1x16x32xf32>
    %20 = vector.extract_strided_slice %17 {offsets = [0, 0, 0], sizes = [1, 16, 8], strides = [1, 1, 1]} : vector<1x16x32xf32> to vector<1x16x8xf32>
    %21 = vector.extract_strided_slice %18 {offsets = [0, 0, 0], sizes = [1, 16, 8], strides = [1, 1, 1]} : vector<1x16x32xf32> to vector<1x16x8xf32>
    "tpu.trace_start"() <{level = 10 : i32, message = "bld,bsd->bls"}> : () -> ()
    %cst_16 = arith.constant dense<0.000000e+00> : vector<1x16x16xf32>
    %22 = tpu.matmul %20, %21, %cst_16 {dimension_numbers = #tpu.dot_dimension_numbers<[2], [2], [1], [1], [0, 0, 0, 1, 1, 1], [0], [0]>} : vector<1x16x8xf32>, vector<1x16x8xf32>, vector<1x16x16xf32> -> vector<1x16x16xf32>
    "tpu.trace_stop"() : () -> ()
    %cst_17 = arith.constant dense<0xFF800000> : vector<1x16xf32>
    %23 = vector.multi_reduction <maximumf>, %22, %cst_17 [2] : vector<1x16x16xf32> to vector<1x16xf32>
    %24 = vector.shape_cast %23 : vector<1x16xf32> to vector<1x16x1xf32>
    %25 = vector.broadcast %24 : vector<1x16x1xf32> to vector<1x16x16xf32>
    %26 = arith.subf %22, %25 : vector<1x16x16xf32>
    %27 = math.exp %26 : vector<1x16x16xf32>
    %cst_18 = arith.constant dense<0.000000e+00> : vector<1x16xf32>
    %28 = vector.multi_reduction <add>, %27, %cst_18 [2] : vector<1x16x16xf32> to vector<1x16xf32>
    %29 = vector.shape_cast %28 : vector<1x16xf32> to vector<1x16x1xf32>
    %30 = tpu.reciprocal %29 {approx = true} : vector<1x16x1xf32> -> vector<1x16x1xf32>
    %31 = vector.broadcast %30 : vector<1x16x1xf32> to vector<1x16x16xf32>
    %32 = arith.mulf %27, %31 : vector<1x16x16xf32>
    %33 = vector.extract_strided_slice %19 {offsets = [0, 0, 0], sizes = [1, 16, 8], strides = [1, 1, 1]} : vector<1x16x32xf32> to vector<1x16x8xf32>
    "tpu.trace_start"() <{level = 10 : i32, message = "bls,bsd->bld"}> : () -> ()
    %cst_19 = arith.constant dense<0.000000e+00> : vector<1x16x8xf32>
    %34 = tpu.matmul %32, %33, %cst_19 {dimension_numbers = #tpu.dot_dimension_numbers<[2], [1], [1], [2], [0, 0, 0, 1, 1, 2], [0], [0]>} : vector<1x16x16xf32>, vector<1x16x8xf32>, vector<1x16x8xf32> -> vector<1x16x8xf32>
    "tpu.trace_stop"() : () -> ()
    %35 = vector.shape_cast %34 : vector<1x16x8xf32> to vector<16x8xf32>
    %c0_20 = arith.constant 0 : index
    %c0_21 = arith.constant 0 : index
    %36 = vector.load %arg20[%c0_20, %c0_21] : memref<16x32xf32, #tpu.memory_space<vmem>>, vector<16x8xf32>
    tpu.vector_store %arg20[%c0_20, %c0_21], %35 {strides = array<i32>} : memref<16x32xf32, #tpu.memory_space<vmem>>, vector<16x8xf32>,
    %c0_22 = arith.constant 0 : index
    %c0_23 = arith.constant 0 : index
    %c0_24 = arith.constant 0 : index
    %37 = vector.load %arg19[%c0_22, %c0_23, %c0_24] : memref<1x16x16xf32, #tpu.memory_space<vmem>>, vector<1x16x16xf32>
    tpu.vector_store %arg19[%c0_22, %c0_23, %c0_24], %32 {strides = array<i32>} : memref<1x16x16xf32, #tpu.memory_space<vmem>>, vector<1x16x16xf32>,
    %38 = vector.extract_strided_slice %17 {offsets = [0, 0, 8], sizes = [1, 16, 8], strides = [1, 1, 1]} : vector<1x16x32xf32> to vector<1x16x8xf32>
    %39 = vector.extract_strided_slice %18 {offsets = [0, 0, 8], sizes = [1, 16, 8], strides = [1, 1, 1]} : vector<1x16x32xf32> to vector<1x16x8xf32>
    "tpu.trace_start"() <{level = 10 : i32, message = "bld,bsd->bls"}> : () -> ()
    %cst_25 = arith.constant dense<0.000000e+00> : vector<1x16x16xf32>
    %40 = tpu.matmul %38, %39, %cst_25 {dimension_numbers = #tpu.dot_dimension_numbers<[2], [2], [1], [1], [0, 0, 0, 1, 1, 1], [0], [0]>} : vector<1x16x8xf32>, vector<1x16x8xf32>, vector<1x16x16xf32> -> vector<1x16x16xf32>
    "tpu.trace_stop"() : () -> ()
    %cst_26 = arith.constant dense<0xFF800000> : vector<1x16xf32>
    %41 = vector.multi_reduction <maximumf>, %40, %cst_26 [2] : vector<1x16x16xf32> to vector<1x16xf32>
    %42 = vector.shape_cast %41 : vector<1x16xf32> to vector<1x16x1xf32>
    %43 = vector.broadcast %42 : vector<1x16x1xf32> to vector<1x16x16xf32>
    %44 = arith.subf %40, %43 : vector<1x16x16xf32>
    %45 = math.exp %44 : vector<1x16x16xf32>
    %cst_27 = arith.constant dense<0.000000e+00> : vector<1x16xf32>
    %46 = vector.multi_reduction <add>, %45, %cst_27 [2] : vector<1x16x16xf32> to vector<1x16xf32>
    %47 = vector.shape_cast %46 : vector<1x16xf32> to vector<1x16x1xf32>
    %48 = tpu.reciprocal %47 {approx = true} : vector<1x16x1xf32> -> vector<1x16x1xf32>
    %49 = vector.broadcast %48 : vector<1x16x1xf32> to vector<1x16x16xf32>
    %50 = arith.mulf %45, %49 : vector<1x16x16xf32>
    %51 = vector.extract_strided_slice %19 {offsets = [0, 0, 8], sizes = [1, 16, 8], strides = [1, 1, 1]} : vector<1x16x32xf32> to vector<1x16x8xf32>
    "tpu.trace_start"() <{level = 10 : i32, message = "bls,bsd->bld"}> : () -> ()
    %cst_28 = arith.constant dense<0.000000e+00> : vector<1x16x8xf32>
    %52 = tpu.matmul %50, %51, %cst_28 {dimension_numbers = #tpu.dot_dimension_numbers<[2], [1], [1], [2], [0, 0, 0, 1, 1, 2], [0], [0]>} : vector<1x16x16xf32>, vector<1x16x8xf32>, vector<1x16x8xf32> -> vector<1x16x8xf32>
    "tpu.trace_stop"() : () -> ()
    %53 = vector.shape_cast %52 : vector<1x16x8xf32> to vector<16x8xf32>
    %c0_29 = arith.constant 0 : index
    %c8 = arith.constant 8 : index
    %54 = vector.load %arg20[%c0_29, %c8] : memref<16x32xf32, #tpu.memory_space<vmem>>, vector<16x8xf32>
    tpu.vector_store %arg20[%c0_29, %c8], %53 {strides = array<i32>} : memref<16x32xf32, #tpu.memory_space<vmem>>, vector<16x8xf32>,
    %c0_30 = arith.constant 0 : index
    %c0_31 = arith.constant 0 : index
    %c0_32 = arith.constant 0 : index
    %55 = vector.load %arg19[%c0_30, %c0_31, %c0_32] : memref<1x16x16xf32, #tpu.memory_space<vmem>>, vector<1x16x16xf32>
    %56 = arith.addf %55, %50 : vector<1x16x16xf32>
    %c0_33 = arith.constant 0 : index
    %c0_34 = arith.constant 0 : index
    %c0_35 = arith.constant 0 : index
    %57 = vector.load %arg19[%c0_33, %c0_34, %c0_35] : memref<1x16x16xf32, #tpu.memory_space<vmem>>, vector<1x16x16xf32>
    tpu.vector_store %arg19[%c0_33, %c0_34, %c0_35], %56 {strides = array<i32>} : memref<1x16x16xf32, #tpu.memory_space<vmem>>, vector<1x16x16xf32>,
    %58 = vector.extract_strided_slice %17 {offsets = [0, 0, 16], sizes = [1, 16, 8], strides = [1, 1, 1]} : vector<1x16x32xf32> to vector<1x16x8xf32>
    %59 = vector.extract_strided_slice %18 {offsets = [0, 0, 16], sizes = [1, 16, 8], strides = [1, 1, 1]} : vector<1x16x32xf32> to vector<1x16x8xf32>
    "tpu.trace_start"() <{level = 10 : i32, message = "bld,bsd->bls"}> : () -> ()
    %cst_36 = arith.constant dense<0.000000e+00> : vector<1x16x16xf32>
    %60 = tpu.matmul %58, %59, %cst_36 {dimension_numbers = #tpu.dot_dimension_numbers<[2], [2], [1], [1], [0, 0, 0, 1, 1, 1], [0], [0]>} : vector<1x16x8xf32>, vector<1x16x8xf32>, vector<1x16x16xf32> -> vector<1x16x16xf32>
    "tpu.trace_stop"() : () -> ()
    %cst_37 = arith.constant dense<0xFF800000> : vector<1x16xf32>
    %61 = vector.multi_reduction <maximumf>, %60, %cst_37 [2] : vector<1x16x16xf32> to vector<1x16xf32>
    %62 = vector.shape_cast %61 : vector<1x16xf32> to vector<1x16x1xf32>
    %63 = vector.broadcast %62 : vector<1x16x1xf32> to vector<1x16x16xf32>
    %64 = arith.subf %60, %63 : vector<1x16x16xf32>
    %65 = math.exp %64 : vector<1x16x16xf32>
    %cst_38 = arith.constant dense<0.000000e+00> : vector<1x16xf32>
    %66 = vector.multi_reduction <add>, %65, %cst_38 [2] : vector<1x16x16xf32> to vector<1x16xf32>
    %67 = vector.shape_cast %66 : vector<1x16xf32> to vector<1x16x1xf32>
    %68 = tpu.reciprocal %67 {approx = true} : vector<1x16x1xf32> -> vector<1x16x1xf32>
    %69 = vector.broadcast %68 : vector<1x16x1xf32> to vector<1x16x16xf32>
    %70 = arith.mulf %65, %69 : vector<1x16x16xf32>
    %71 = vector.extract_strided_slice %19 {offsets = [0, 0, 16], sizes = [1, 16, 8], strides = [1, 1, 1]} : vector<1x16x32xf32> to vector<1x16x8xf32>
    "tpu.trace_start"() <{level = 10 : i32, message = "bls,bsd->bld"}> : () -> ()
    %cst_39 = arith.constant dense<0.000000e+00> : vector<1x16x8xf32>
    %72 = tpu.matmul %70, %71, %cst_39 {dimension_numbers = #tpu.dot_dimension_numbers<[2], [1], [1], [2], [0, 0, 0, 1, 1, 2], [0], [0]>} : vector<1x16x16xf32>, vector<1x16x8xf32>, vector<1x16x8xf32> -> vector<1x16x8xf32>
    "tpu.trace_stop"() : () -> ()
    %73 = vector.shape_cast %72 : vector<1x16x8xf32> to vector<16x8xf32>
    %c0_40 = arith.constant 0 : index
    %c16 = arith.constant 16 : index
    %74 = vector.load %arg20[%c0_40, %c16] : memref<16x32xf32, #tpu.memory_space<vmem>>, vector<16x8xf32>
    tpu.vector_store %arg20[%c0_40, %c16], %73 {strides = array<i32>} : memref<16x32xf32, #tpu.memory_space<vmem>>, vector<16x8xf32>,
    %c0_41 = arith.constant 0 : index
    %c0_42 = arith.constant 0 : index
    %c0_43 = arith.constant 0 : index
    %75 = vector.load %arg19[%c0_41, %c0_42, %c0_43] : memref<1x16x16xf32, #tpu.memory_space<vmem>>, vector<1x16x16xf32>
    %76 = arith.addf %75, %70 : vector<1x16x16xf32>
    %c0_44 = arith.constant 0 : index
    %c0_45 = arith.constant 0 : index
    %c0_46 = arith.constant 0 : index
    %77 = vector.load %arg19[%c0_44, %c0_45, %c0_46] : memref<1x16x16xf32, #tpu.memory_space<vmem>>, vector<1x16x16xf32>
    tpu.vector_store %arg19[%c0_44, %c0_45, %c0_46], %76 {strides = array<i32>} : memref<1x16x16xf32, #tpu.memory_space<vmem>>, vector<1x16x16xf32>,
    %78 = vector.extract_strided_slice %17 {offsets = [0, 0, 24], sizes = [1, 16, 8], strides = [1, 1, 1]} : vector<1x16x32xf32> to vector<1x16x8xf32>
    %79 = vector.extract_strided_slice %18 {offsets = [0, 0, 24], sizes = [1, 16, 8], strides = [1, 1, 1]} : vector<1x16x32xf32> to vector<1x16x8xf32>
    "tpu.trace_start"() <{level = 10 : i32, message = "bld,bsd->bls"}> : () -> ()
    %cst_47 = arith.constant dense<0.000000e+00> : vector<1x16x16xf32>
    %80 = tpu.matmul %78, %79, %cst_47 {dimension_numbers = #tpu.dot_dimension_numbers<[2], [2], [1], [1], [0, 0, 0, 1, 1, 1], [0], [0]>} : vector<1x16x8xf32>, vector<1x16x8xf32>, vector<1x16x16xf32> -> vector<1x16x16xf32>
    "tpu.trace_stop"() : () -> ()
    %cst_48 = arith.constant dense<0xFF800000> : vector<1x16xf32>
    %81 = vector.multi_reduction <maximumf>, %80, %cst_48 [2] : vector<1x16x16xf32> to vector<1x16xf32>
    %82 = vector.shape_cast %81 : vector<1x16xf32> to vector<1x16x1xf32>
    %83 = vector.broadcast %82 : vector<1x16x1xf32> to vector<1x16x16xf32>
    %84 = arith.subf %80, %83 : vector<1x16x16xf32>
    %85 = math.exp %84 : vector<1x16x16xf32>
    %cst_49 = arith.constant dense<0.000000e+00> : vector<1x16xf32>
    %86 = vector.multi_reduction <add>, %85, %cst_49 [2] : vector<1x16x16xf32> to vector<1x16xf32>
    %87 = vector.shape_cast %86 : vector<1x16xf32> to vector<1x16x1xf32>
    %88 = tpu.reciprocal %87 {approx = true} : vector<1x16x1xf32> -> vector<1x16x1xf32>
    %89 = vector.broadcast %88 : vector<1x16x1xf32> to vector<1x16x16xf32>
    %90 = arith.mulf %85, %89 : vector<1x16x16xf32>
    %91 = vector.extract_strided_slice %19 {offsets = [0, 0, 24], sizes = [1, 16, 8], strides = [1, 1, 1]} : vector<1x16x32xf32> to vector<1x16x8xf32>
    "tpu.trace_start"() <{level = 10 : i32, message = "bls,bsd->bld"}> : () -> ()
    %cst_50 = arith.constant dense<0.000000e+00> : vector<1x16x8xf32>
    %92 = tpu.matmul %90, %91, %cst_50 {dimension_numbers = #tpu.dot_dimension_numbers<[2], [1], [1], [2], [0, 0, 0, 1, 1, 2], [0], [0]>} : vector<1x16x16xf32>, vector<1x16x8xf32>, vector<1x16x8xf32> -> vector<1x16x8xf32>
    "tpu.trace_stop"() : () -> ()
    %93 = vector.shape_cast %92 : vector<1x16x8xf32> to vector<16x8xf32>
    %c0_51 = arith.constant 0 : index
    %c24 = arith.constant 24 : index
    %94 = vector.load %arg20[%c0_51, %c24] : memref<16x32xf32, #tpu.memory_space<vmem>>, vector<16x8xf32>
    tpu.vector_store %arg20[%c0_51, %c24], %93 {strides = array<i32>} : memref<16x32xf32, #tpu.memory_space<vmem>>, vector<16x8xf32>,
    %c0_52 = arith.constant 0 : index
    %c0_53 = arith.constant 0 : index
    %c0_54 = arith.constant 0 : index
    %95 = vector.load %arg19[%c0_52, %c0_53, %c0_54] : memref<1x16x16xf32, #tpu.memory_space<vmem>>, vector<1x16x16xf32>
    %96 = arith.addf %95, %90 : vector<1x16x16xf32>
    %c0_55 = arith.constant 0 : index
    %c0_56 = arith.constant 0 : index
    %c0_57 = arith.constant 0 : index
    %97 = vector.load %arg19[%c0_55, %c0_56, %c0_57] : memref<1x16x16xf32, #tpu.memory_space<vmem>>, vector<1x16x16xf32>
    tpu.vector_store %arg19[%c0_55, %c0_56, %c0_57], %96 {strides = array<i32>} : memref<1x16x16xf32, #tpu.memory_space<vmem>>, vector<1x16x16xf32>,
    %c0_58 = arith.constant 0 : index
    %c0_59 = arith.constant 0 : index
    %c0_60 = arith.constant 0 : index
    %98 = vector.load %arg19[%c0_58, %c0_59, %c0_60] : memref<1x16x16xf32, #tpu.memory_space<vmem>>, vector<1x16x16xf32>
    %cst_61 = arith.constant 2.500000e-01 : f32
    %99 = vector.broadcast %cst_61 : f32 to vector<1x16x16xf32>
    %100 = arith.mulf %98, %99 : vector<1x16x16xf32>
    %c0_62 = arith.constant 0 : index
    %c0_63 = arith.constant 0 : index
    %c0_64 = arith.constant 0 : index
    %101 = vector.load %arg19[%c0_62, %c0_63, %c0_64] : memref<1x16x16xf32, #tpu.memory_space<vmem>>, vector<1x16x16xf32>
    tpu.vector_store %arg19[%c0_62, %c0_63, %c0_64], %100 {strides = array<i32>} : memref<1x16x16xf32, #tpu.memory_space<vmem>>, vector<1x16x16xf32>,
    %c0_65 = arith.constant 0 : index
    %c0_66 = arith.constant 0 : index
    %102 = vector.load %arg20[%c0_65, %c0_66] : memref<16x32xf32, #tpu.memory_space<vmem>>, vector<16x32xf32>
    %c0_67 = arith.constant 0 : index
    %c0_68 = arith.constant 0 : index
    %103 = vector.load %arg8[%c0_67, %c0_68] : memref<32x32xf32, #tpu.memory_space<vmem>>, vector<32x32xf32>
    %cst_69 = arith.constant dense<0.000000e+00> : vector<16x32xf32>
    %104 = tpu.matmul %102, %103, %cst_69 {dimension_numbers = #tpu.dot_dimension_numbers<[1], [0], [0], [1], [0, 0, 1, 1], [], []>} : vector<16x32xf32>, vector<32x32xf32>, vector<16x32xf32> -> vector<16x32xf32>
    %c0_70 = arith.constant 0 : index
    %c0_71 = arith.constant 0 : index
    %105 = vector.load %arg9[%c0_70, %c0_71] : memref<1x32xf32, #tpu.memory_space<vmem>>, vector<1x32xf32>
    %106 = vector.broadcast %105 : vector<1x32xf32> to vector<16x32xf32>
    %107 = arith.addf %104, %106 : vector<16x32xf32>
    %108 = arith.addf %1, %107 : vector<16x32xf32>
    %c0_72 = arith.constant 0 : index
    %c0_73 = arith.constant 0 : index
    %109 = vector.load %arg10[%c0_72, %c0_73] : memref<1x32xf32, #tpu.memory_space<vmem>>, vector<1x32xf32>
    %c0_74 = arith.constant 0 : index
    %c0_75 = arith.constant 0 : index
    %110 = vector.load %arg11[%c0_74, %c0_75] : memref<1x32xf32, #tpu.memory_space<vmem>>, vector<1x32xf32>
    %cst_76 = arith.constant dense<0.000000e+00> : vector<16xf32>
    %111 = vector.multi_reduction <add>, %108, %cst_76 [1] : vector<16x32xf32> to vector<16xf32>
    %112 = vector.shape_cast %111 : vector<16xf32> to vector<16x1xf32>
    %cst_77 = arith.constant 3.200000e+01 : f32
    %113 = vector.broadcast %cst_77 : f32 to vector<16x1xf32>
    %114 = arith.divf %112, %113 : vector<16x1xf32>
    %115 = vector.broadcast %114 : vector<16x1xf32> to vector<16x32xf32>
    %116 = arith.subf %108, %115 : vector<16x32xf32>
    %117 = arith.mulf %116, %116 : vector<16x32xf32>
    %cst_78 = arith.constant dense<0.000000e+00> : vector<16xf32>
    %118 = vector.multi_reduction <add>, %117, %cst_78 [1] : vector<16x32xf32> to vector<16xf32>
    %119 = vector.shape_cast %118 : vector<16xf32> to vector<16x1xf32>
    %cst_79 = arith.constant 3.200000e+01 : f32
    %120 = vector.broadcast %cst_79 : f32 to vector<16x1xf32>
    %121 = arith.divf %119, %120 : vector<16x1xf32>
    %cst_80 = arith.constant 9.99999997E-7 : f32
    %122 = vector.broadcast %cst_80 : f32 to vector<16x1xf32>
    %123 = arith.addf %121, %122 : vector<16x1xf32>
    %124 = math.rsqrt %123 : vector<16x1xf32>
    %125 = vector.broadcast %124 : vector<16x1xf32> to vector<16x32xf32>
    %126 = arith.mulf %116, %125 : vector<16x32xf32>
    %127 = vector.broadcast %109 : vector<1x32xf32> to vector<16x32xf32>
    %128 = arith.mulf %126, %127 : vector<16x32xf32>
    %129 = vector.broadcast %110 : vector<1x32xf32> to vector<16x32xf32>
    %130 = arith.addf %128, %129 : vector<16x32xf32>
    %c0_81 = arith.constant 0 : index
    %c0_82 = arith.constant 0 : index
    %131 = vector.load %arg12[%c0_81, %c0_82] : memref<32x64xf32, #tpu.memory_space<vmem>>, vector<32x64xf32>
    %cst_83 = arith.constant dense<0.000000e+00> : vector<16x64xf32>
    %132 = tpu.matmul %130, %131, %cst_83 {dimension_numbers = #tpu.dot_dimension_numbers<[1], [0], [0], [1], [0, 0, 1, 1], [], []>} : vector<16x32xf32>, vector<32x64xf32>, vector<16x64xf32> -> vector<16x64xf32>
    %c0_84 = arith.constant 0 : index
    %c0_85 = arith.constant 0 : index
    %133 = vector.load %arg13[%c0_84, %c0_85] : memref<1x64xf32, #tpu.memory_space<vmem>>, vector<1x64xf32>
    %134 = vector.broadcast %133 : vector<1x64xf32> to vector<16x64xf32>
    %135 = arith.addf %132, %134 : vector<16x64xf32>
    %cst_86 = arith.constant 0.000000e+00 : f32
    %136 = vector.broadcast %cst_86 : f32 to vector<16x64xf32>
    %137 = arith.maximumf %135, %136 : vector<16x64xf32>
    %c0_87 = arith.constant 0 : index
    %c0_88 = arith.constant 0 : index
    %138 = vector.load %arg14[%c0_87, %c0_88] : memref<64x32xf32, #tpu.memory_space<vmem>>, vector<64x32xf32>
    %cst_89 = arith.constant dense<0.000000e+00> : vector<16x32xf32>
    %139 = tpu.matmul %137, %138, %cst_89 {dimension_numbers = #tpu.dot_dimension_numbers<[1], [0], [0], [1], [0, 0, 1, 1], [], []>} : vector<16x64xf32>, vector<64x32xf32>, vector<16x32xf32> -> vector<16x32xf32>
    %c0_90 = arith.constant 0 : index
    %c0_91 = arith.constant 0 : index
    %140 = vector.load %arg15[%c0_90, %c0_91] : memref<1x32xf32, #tpu.memory_space<vmem>>, vector<1x32xf32>
    %141 = vector.broadcast %140 : vector<1x32xf32> to vector<16x32xf32>
    %142 = arith.addf %139, %141 : vector<16x32xf32>
    %143 = arith.addf %130, %142 : vector<16x32xf32>
    %c0_92 = arith.constant 0 : index
    %c0_93 = arith.constant 0 : index
    %144 = vector.load %arg16[%c0_92, %c0_93] : memref<1x32xf32, #tpu.memory_space<vmem>>, vector<1x32xf32>
    %c0_94 = arith.constant 0 : index
    %c0_95 = arith.constant 0 : index
    %145 = vector.load %arg17[%c0_94, %c0_95] : memref<1x32xf32, #tpu.memory_space<vmem>>, vector<1x32xf32>
    %cst_96 = arith.constant dense<0.000000e+00> : vector<16xf32>
    %146 = vector.multi_reduction <add>, %143, %cst_96 [1] : vector<16x32xf32> to vector<16xf32>
    %147 = vector.shape_cast %146 : vector<16xf32> to vector<16x1xf32>
    %cst_97 = arith.constant 3.200000e+01 : f32
    %148 = vector.broadcast %cst_97 : f32 to vector<16x1xf32>
    %149 = arith.divf %147, %148 : vector<16x1xf32>
    %150 = vector.broadcast %149 : vector<16x1xf32> to vector<16x32xf32>
    %151 = arith.subf %143, %150 : vector<16x32xf32>
    %152 = arith.mulf %151, %151 : vector<16x32xf32>
    %cst_98 = arith.constant dense<0.000000e+00> : vector<16xf32>
    %153 = vector.multi_reduction <add>, %152, %cst_98 [1] : vector<16x32xf32> to vector<16xf32>
    %154 = vector.shape_cast %153 : vector<16xf32> to vector<16x1xf32>
    %cst_99 = arith.constant 3.200000e+01 : f32
    %155 = vector.broadcast %cst_99 : f32 to vector<16x1xf32>
    %156 = arith.divf %154, %155 : vector<16x1xf32>
    %cst_100 = arith.constant 9.99999997E-7 : f32
    %157 = vector.broadcast %cst_100 : f32 to vector<16x1xf32>
    %158 = arith.addf %156, %157 : vector<16x1xf32>
    %159 = math.rsqrt %158 : vector<16x1xf32>
    %160 = vector.broadcast %159 : vector<16x1xf32> to vector<16x32xf32>
    %161 = arith.mulf %151, %160 : vector<16x32xf32>
    %162 = vector.broadcast %144 : vector<1x32xf32> to vector<16x32xf32>
    %163 = arith.mulf %161, %162 : vector<16x32xf32>
    %164 = vector.broadcast %145 : vector<1x32xf32> to vector<16x32xf32>
    %165 = arith.addf %163, %164 : vector<16x32xf32>
    %166 = vector.shape_cast %165 : vector<16x32xf32> to vector<1x16x32xf32>
    %c0_101 = arith.constant 0 : index
    %c0_102 = arith.constant 0 : index
    %c0_103 = arith.constant 0 : index
    %167 = vector.load %arg18[%c0_101, %c0_102, %c0_103] : memref<1x16x32xf32, #tpu.memory_space<vmem>>, vector<1x16x32xf32>
    tpu.vector_store %arg18[%c0_101, %c0_102, %c0_103], %166 {strides = array<i32>} : memref<1x16x32xf32, #tpu.memory_space<vmem>>, vector<1x16x32xf32>,
    return
  }
  func.func @transform_0(%arg0: i32) -> (i32, i32, i32) {
    %c0_i32 = arith.constant 0 : i32
    %c0_i32_0 = arith.constant 0 : i32
    %c0_i32_1 = arith.constant 0 : i32
    return %arg0, %c0_i32, %c0_i32_0 : i32, i32, i32
  }
  func.func @transform_1(%arg0: i32) -> (i32, i32) {
    %c0_i32 = arith.constant 0 : i32
    %c0_i32_0 = arith.constant 0 : i32
    %c0_i32_1 = arith.constant 0 : i32
    return %c0_i32, %c0_i32_0 : i32, i32
  }
  func.func @transform_2(%arg0: i32) -> (i32, i32) {
    %c0_i32 = arith.constant 0 : i32
    %c0_i32_0 = arith.constant 0 : i32
    %c0_i32_1 = arith.constant 0 : i32
    return %c0_i32, %c0_i32_0 : i32, i32
  }
  func.func @transform_3(%arg0: i32) -> (i32, i32) {
    %c0_i32 = arith.constant 0 : i32
    %c0_i32_0 = arith.constant 0 : i32
    %c0_i32_1 = arith.constant 0 : i32
    return %c0_i32, %c0_i32_0 : i32, i32
  }
  func.func @transform_4(%arg0: i32) -> (i32, i32) {
    %c0_i32 = arith.constant 0 : i32
    %c0_i32_0 = arith.constant 0 : i32
    %c0_i32_1 = arith.constant 0 : i32
    return %c0_i32, %c0_i32_0 : i32, i32
  }
  func.func @transform_5(%arg0: i32) -> (i32, i32) {
    %c0_i32 = arith.constant 0 : i32
    %c0_i32_0 = arith.constant 0 : i32
    %c0_i32_1 = arith.constant 0 : i32
    return %c0_i32, %c0_i32_0 : i32, i32
  }
  func.func @transform_6(%arg0: i32) -> (i32, i32) {
    %c0_i32 = arith.constant 0 : i32
    %c0_i32_0 = arith.constant 0 : i32
    %c0_i32_1 = arith.constant 0 : i32
    return %c0_i32, %c0_i32_0 : i32, i32
  }
  func.func @transform_7(%arg0: i32) -> (i32, i32) {
    %c0_i32 = arith.constant 0 : i32
    %c0_i32_0 = arith.constant 0 : i32
    %c0_i32_1 = arith.constant 0 : i32
    return %c0_i32, %c0_i32_0 : i32, i32
  }
  func.func @transform_8(%arg0: i32) -> (i32, i32) {
    %c0_i32 = arith.constant 0 : i32
    %c0_i32_0 = arith.constant 0 : i32
    %c0_i32_1 = arith.constant 0 : i32
    return %c0_i32, %c0_i32_0 : i32, i32
  }
  func.func @transform_9(%arg0: i32) -> (i32, i32) {
    %c0_i32 = arith.constant 0 : i32
    %c0_i32_0 = arith.constant 0 : i32
    %c0_i32_1 = arith.constant 0 : i32
    return %c0_i32, %c0_i32_0 : i32, i32
  }
  func.func @transform_10(%arg0: i32) -> (i32, i32) {
    %c0_i32 = arith.constant 0 : i32
    %c0_i32_0 = arith.constant 0 : i32
    %c0_i32_1 = arith.constant 0 : i32
    return %c0_i32, %c0_i32_0 : i32, i32
  }
  func.func @transform_11(%arg0: i32) -> (i32, i32) {
    %c0_i32 = arith.constant 0 : i32
    %c0_i32_0 = arith.constant 0 : i32
    %c0_i32_1 = arith.constant 0 : i32
    return %c0_i32, %c0_i32_0 : i32, i32
  }
  func.func @transform_12(%arg0: i32) -> (i32, i32) {
    %c0_i32 = arith.constant 0 : i32
    %c0_i32_0 = arith.constant 0 : i32
    %c0_i32_1 = arith.constant 0 : i32
    return %c0_i32, %c0_i32_0 : i32, i32
  }
  func.func @transform_13(%arg0: i32) -> (i32, i32) {
    %c0_i32 = arith.constant 0 : i32
    %c0_i32_0 = arith.constant 0 : i32
    %c0_i32_1 = arith.constant 0 : i32
    return %c0_i32, %c0_i32_0 : i32, i32
  }
  func.func @transform_14(%arg0: i32) -> (i32, i32) {
    %c0_i32 = arith.constant 0 : i32
    %c0_i32_0 = arith.constant 0 : i32
    %c0_i32_1 = arith.constant 0 : i32
    return %c0_i32, %c0_i32_0 : i32, i32
  }
  func.func @transform_15(%arg0: i32) -> (i32, i32) {
    %c0_i32 = arith.constant 0 : i32
    %c0_i32_0 = arith.constant 0 : i32
    %c0_i32_1 = arith.constant 0 : i32
    return %c0_i32, %c0_i32_0 : i32, i32
  }
  func.func @transform_16(%arg0: i32) -> (i32, i32) {
    %c0_i32 = arith.constant 0 : i32
    %c0_i32_0 = arith.constant 0 : i32
    %c0_i32_1 = arith.constant 0 : i32
    return %c0_i32, %c0_i32_0 : i32, i32
  }
  func.func @transform_17(%arg0: i32) -> (i32, i32, i32) {
    %c0_i32 = arith.constant 0 : i32
    %c0_i32_0 = arith.constant 0 : i32
    %c0_i32_1 = arith.constant 0 : i32
    return %arg0, %c0_i32, %c0_i32_0 : i32, i32, i32
  }
  func.func @transform_18(%arg0: i32) -> (i32, i32, i32) {
    %c0_i32 = arith.constant 0 : i32
    %c0_i32_0 = arith.constant 0 : i32
    %c0_i32_1 = arith.constant 0 : i32
    return %arg0, %c0_i32, %c0_i32_0 : i32, i32, i32
  }
}

</mosaic_0001>

<llo_original>
// kernel: tpu_custom_call.1
$region0: #{tpu_custom_call.1}
  #allocation0 [shape = 'u32[]', space=smem, size = 0x4, offset = 0x4, fixed_abs, tag = 'smem constant byte address 0x4 - core index']
  #allocation1 [shape = 'u32[72,128]{1,0:T(1,128)}', space=vmem, size = 0x9000, scoped, tag = 'internal scratch']
  #allocation2 [shape = 'f32[16,32]{1,0:T(8,128)}', space=vmem, size = 0x2000, scoped, tag = 'scratch operand']
  %s0 = inlined_call_operand.vmem [shape: f32[2,16,32], index: 0, kind: input, shape index: {}]
  %s1 = inlined_call_operand.vmem [shape: f32[32,32], index: 1, kind: input, shape index: {}]
  %s2 = inlined_call_operand.vmem [shape: f32[32,32], index: 2, kind: input, shape index: {}]
  %s3 = inlined_call_operand.hbm [shape: f32[32,32], index: 3, kind: input, shape index: {}]
  %s4 = inlined_call_operand.vmem [shape: f32[1,32], index: 4, kind: input, shape index: {}]
  %s5 = inlined_call_operand.vmem [shape: f32[1,32], index: 5, kind: input, shape index: {}]
  %s6 = inlined_call_operand.vmem [shape: f32[1,32], index: 6, kind: input, shape index: {}]
  %s7 = inlined_call_operand.hbm [shape: f32[32,32], index: 7, kind: input, shape index: {}]
  %s8 = inlined_call_operand.vmem [shape: f32[1,32], index: 8, kind: input, shape index: {}]
  %s9 = inlined_call_operand.vmem [shape: f32[1,32], index: 9, kind: input, shape index: {}]
  %s10 = inlined_call_operand.vmem [shape: f32[1,32], index: 10, kind: input, shape index: {}]
  %s11 = inlined_call_operand.hbm [shape: f32[32,64], index: 11, kind: input, shape index: {}]
  %s12 = inlined_call_operand.vmem [shape: f32[1,64], index: 12, kind: input, shape index: {}]
  %s13 = inlined_call_operand.vmem [shape: f32[64,32], index: 13, kind: input, shape index: {}]
  %s14 = inlined_call_operand.vmem [shape: f32[1,32], index: 14, kind: input, shape index: {}]
  %s15 = inlined_call_operand.vmem [shape: f32[1,32], index: 15, kind: input, shape index: {}]
  %s16 = inlined_call_operand.vmem [shape: f32[1,32], index: 16, kind: input, shape index: {}]
  %s17 = inlined_call_operand.hbm [shape: f32[2,16,32], index: 17, kind: output, shape index: {0}]
  %s18 = inlined_call_operand.hbm [shape: f32[2,16,16], index: 18, kind: output, shape index: {1}]
  %19 = xla_tuple %s17, %s18
  %s20 = sld [smem:[#allocation0]]
  $region121: #{tpu_custom_call.1} parent=0
    _
  %s22 = ssub.s32 1, %s20
  %s23 = scalar_select 0, %s22, %s20
  $region1: #{tpu_custom_call.1} parent=0
    #allocation3 [shape = 'u8[16384]{0}', space=vmem, size = 0x4000, scoped, tag = 'input window, operand 3, single buffered']
    #allocation4 [shape = 's32[2]{0}', space=sflag, size = 0x8, scoped, tag = 'scoped memory for tpu_custom_call.1']
    #allocation5 [shape = 's32[2]{0}', space=sflag, size = 0x8, scoped, tag = 'scoped memory for tpu_custom_call.1']
    #allocation6 [shape = 'u8[16384]{0}', space=vmem, size = 0x4000, scoped, tag = 'input window, operand 7, single buffered']
    #allocation7 [shape = 's32[1]{0}', space=sflag, size = 0x4, scoped, tag = 'scoped memory for tpu_custom_call.1']
    #allocation8 [shape = 'u8[16384]{0}', space=vmem, size = 0x4000, scoped, tag = 'input window, operand 11, single buffered']
    #allocation9 [shape = 'u8[16384]{0}', space=vmem, size = 0x4000, scoped, tag = 'output window, operand 0']
    #allocation10 [shape = 'u8[16384]{0}', space=vmem, size = 0x4000, scoped, tag = 'output window, operand 1']
    #allocation11 [shape = 's32[2]{0}', space=sflag, size = 0x8, scoped, tag = 'scoped memory for tpu_custom_call.1']
    %24 = vsyncpa [#allocation4], 0
    %25 = vsyncpa [#allocation7], 0
    %26 = vsyncpa [#allocation5], 0
    %s27 = scalar_lea.sflag [#allocation5], 1
    %28 = vsyncpa %s27, 0
    %29 = vsyncpa [#allocation11], 0
    %s30 = scalar_lea.sflag [#allocation11], 1
    %31 = vsyncpa %s30, 0
    loop: start=0, step=1, limit=4
    $region2: #{tpu_custom_call.1} parent=1 // loop_pre_header
      _
    $region3: #{tpu_custom_call.1} parent=1 // loop_header
      %s33 = sphi 0, %s37
      %p34 = scmp.ge.s32.totalorder %s33, 4
      %s43 = sphi 0, %s45
      %s46 = sphi 0, %s43
      %s47 = sphi 0, %s46
      %s63 = sphi 0, %s47
      %s67 = sphi 0, %s67
      %s69 = sphi 0, %s67
      %s70 = sphi 0, %s69
      %s84 = sphi 0, %s70
      %s88 = sphi 0, %s88
      %s90 = sphi 0, %s88
      %s91 = sphi 0, %s90
      %s105 = sphi 0, %s91
      %s109 = sphi 0, %s109
      %s111 = sphi 0, %s109
      %s112 = sphi 0, %s111
      %s126 = sphi 0, %s112
      %s130 = sphi 0, %s130
      %s132 = sphi 0, %s130
      %s133 = sphi 0, %s132
      %s147 = sphi 0, %s133
      %s151 = sphi 0, %s151
      %s153 = sphi 0, %s151
      %s154 = sphi 0, %s153
      %s168 = sphi 0, %s154
      %s172 = sphi 0, %s172
      %s174 = sphi 0, %s172
      %s175 = sphi 0, %s174
      %s189 = sphi 0, %s175
      %s193 = sphi 0, %s193
      %s195 = sphi 0, %s193
      %s196 = sphi 0, %s195
      %s210 = sphi 0, %s196
      %s214 = sphi 0, %s214
      %s216 = sphi 0, %s214
      %s217 = sphi 0, %s216
      %s231 = sphi 0, %s217
      %s235 = sphi 0, %s235
      %s237 = sphi 0, %s235
      %s238 = sphi 0, %s237
      %s252 = sphi 0, %s238
      %s256 = sphi 0, %s256
      %s258 = sphi 0, %s256
      %s259 = sphi 0, %s258
      %s273 = sphi 0, %s259
      %s277 = sphi 0, %s277
      %s279 = sphi 0, %s277
      %s280 = sphi 0, %s279
      %s294 = sphi 0, %s280
      %s298 = sphi 0, %s298
      %s300 = sphi 0, %s298
      %s301 = sphi 0, %s300
      %s315 = sphi 0, %s301
      %s319 = sphi 0, %s319
      %s321 = sphi 0, %s319
      %s322 = sphi 0, %s321
      %s336 = sphi 0, %s322
      %s340 = sphi 0, %s340
      %s342 = sphi 0, %s340
      %s343 = sphi 0, %s342
      %s357 = sphi 0, %s343
      %s361 = sphi 0, %s361
      %s363 = sphi 0, %s361
      %s364 = sphi 0, %s363
      %s378 = sphi 0, %s364
      %s382 = sphi 0, %s382
      %s384 = sphi 0, %s382
      %s385 = sphi 0, %s384
      %s399 = sphi 0, %s385
      %s405 = sphi 0, %s407
      %s408 = sphi 0, %s405
      %s409 = sphi 0, %s408
      %s425 = sphi 0, %s409
      %s431 = sphi 0, %s433
      %s434 = sphi 0, %s431
      %s435 = sphi 0, %s434
      %s451 = sphi 0, %s435
    $region4: #{tpu_custom_call.1} parent=1 // loop_header_branch
      %36 = sbr.rel (%p34) target = $region8
    $region5: #{tpu_custom_call.1} parent=1 // loop_body
      %s38 = ssub.s32 %s33, 1
      %s39 = ssub.s32 %s33, 2
      %s40 = sadd.s32 %s33, 1
      %s41 = ssub.s32 %s33, %s40
      %p42 = scmp.eq.s32.totalorder %s41, 0
      %s44 = sadd.s32 %s43, 1
      %s45 = scalar_select %p42, %s43, %s44
      %p48 = pneg %p42
      %p49 = scmp.eq.s32.totalorder %s33, 1
      %p50 = por %p48, %p49
      %p51 = scmp.ne.s32.totalorder %s43, %s46
      %p52 = scmp.eq.s32.totalorder %s33, 0
      %p53 = por %p51, %p52
      %p54 = scmp.ne.s32.totalorder %s43, %s46
      %p55 = scmp.eq.s32.totalorder %s38, 1
      %p56 = por %p54, %p55
      %p57 = scmp.ne.s32.totalorder %s46, %s47
      %p58 = scmp.eq.s32.totalorder %s38, 0
      %p59 = por %p57, %p58
      %p60 = scmp.ne.s32.totalorder %s46, %s47
      %p61 = scmp.eq.s32.totalorder %s39, 1
      %p62 = por %p60, %p61
      %p64 = scmp.ne.s32.totalorder %s47, %s63
      %p65 = scmp.eq.s32.totalorder %s39, 0
      %p66 = por %p64, %p65
      %s68 = sadd.s32 %s67, 1
      %p71 = scmp.eq.s32.totalorder %s33, 1
      %p72 = scmp.ne.s32.totalorder %s67, %s69
      %p73 = scmp.eq.s32.totalorder %s33, 0
      %p74 = por %p72, %p73
      %p75 = scmp.ne.s32.totalorder %s67, %s69
      %p76 = scmp.eq.s32.totalorder %s38, 1
      %p77 = por %p75, %p76
      %p78 = scmp.ne.s32.totalorder %s69, %s70
      %p79 = scmp.eq.s32.totalorder %s38, 0
      %p80 = por %p78, %p79
      %p81 = scmp.ne.s32.totalorder %s69, %s70
      %p82 = scmp.eq.s32.totalorder %s39, 1
      %p83 = por %p81, %p82
      %p85 = scmp.ne.s32.totalorder %s70, %s84
      %p86 = scmp.eq.s32.totalorder %s39, 0
      %p87 = por %p85, %p86
      %s89 = sadd.s32 %s88, 1
      %p92 = scmp.eq.s32.totalorder %s33, 1
      %p93 = scmp.ne.s32.totalorder %s88, %s90
      %p94 = scmp.eq.s32.totalorder %s33, 0
      %p95 = por %p93, %p94
      %p96 = scmp.ne.s32.totalorder %s88, %s90
      %p97 = scmp.eq.s32.totalorder %s38, 1
      %p98 = por %p96, %p97
      %p99 = scmp.ne.s32.totalorder %s90, %s91
      %p100 = scmp.eq.s32.totalorder %s38, 0
      %p101 = por %p99, %p100
      %p102 = scmp.ne.s32.totalorder %s90, %s91
      %p103 = scmp.eq.s32.totalorder %s39, 1
      %p104 = por %p102, %p103
      %p106 = scmp.ne.s32.totalorder %s91, %s105
      %p107 = scmp.eq.s32.totalorder %s39, 0
      %p108 = por %p106, %p107
      %s110 = sadd.s32 %s109, 1
      %p113 = scmp.eq.s32.totalorder %s33, 1
      %p114 = scmp.ne.s32.totalorder %s109, %s111
      %p115 = scmp.eq.s32.totalorder %s33, 0
      %p116 = por %p114, %p115
      %p117 = scmp.ne.s32.totalorder %s109, %s111
      %p118 = scmp.eq.s32.totalorder %s38, 1
      %p119 = por %p117, %p118
      %p120 = scmp.ne.s32.totalorder %s111, %s112
      %p121 = scmp.eq.s32.totalorder %s38, 0
      %p122 = por %p120, %p121
      %p123 = scmp.ne.s32.totalorder %s111, %s112
      %p124 = scmp.eq.s32.totalorder %s39, 1
      %p125 = por %p123, %p124
      %p127 = scmp.ne.s32.totalorder %s112, %s126
      %p128 = scmp.eq.s32.totalorder %s39, 0
      %p129 = por %p127, %p128
      %s131 = sadd.s32 %s130, 1
      %p134 = scmp.eq.s32.totalorder %s33, 1
      %p135 = scmp.ne.s32.totalorder %s130, %s132
      %p136 = scmp.eq.s32.totalorder %s33, 0
      %p137 = por %p135, %p136
      %p138 = scmp.ne.s32.totalorder %s130, %s132
      %p139 = scmp.eq.s32.totalorder %s38, 1
      %p140 = por %p138, %p139
      %p141 = scmp.ne.s32.totalorder %s132, %s133
      %p142 = scmp.eq.s32.totalorder %s38, 0
      %p143 = por %p141, %p142
      %p144 = scmp.ne.s32.totalorder %s132, %s133
      %p145 = scmp.eq.s32.totalorder %s39, 1
      %p146 = por %p144, %p145
      %p148 = scmp.ne.s32.totalorder %s133, %s147
      %p149 = scmp.eq.s32.totalorder %s39, 0
      %p150 = por %p148, %p149
      %s152 = sadd.s32 %s151, 1
      %p155 = scmp.eq.s32.totalorder %s33, 1
      %p156 = scmp.ne.s32.totalorder %s151, %s153
      %p157 = scmp.eq.s32.totalorder %s33, 0
      %p158 = por %p156, %p157
      %p159 = scmp.ne.s32.totalorder %s151, %s153
      %p160 = scmp.eq.s32.totalorder %s38, 1
      %p161 = por %p159, %p160
      %p162 = scmp.ne.s32.totalorder %s153, %s154
      %p163 = scmp.eq.s32.totalorder %s38, 0
      %p164 = por %p162, %p163
      %p165 = scmp.ne.s32.totalorder %s153, %s154
      %p166 = scmp.eq.s32.totalorder %s39, 1
      %p167 = por %p165, %p166
      %p169 = scmp.ne.s32.totalorder %s154, %s168
      %p170 = scmp.eq.s32.totalorder %s39, 0
      %p171 = por %p169, %p170
      %s173 = sadd.s32 %s172, 1
      %p176 = scmp.eq.s32.totalorder %s33, 1
      %p177 = scmp.ne.s32.totalorder %s172, %s174
      %p178 = scmp.eq.s32.totalorder %s33, 0
      %p179 = por %p177, %p178
      %p180 = scmp.ne.s32.totalorder %s172, %s174
      %p181 = scmp.eq.s32.totalorder %s38, 1
      %p182 = por %p180, %p181
      %p183 = scmp.ne.s32.totalorder %s174, %s175
      %p184 = scmp.eq.s32.totalorder %s38, 0
      %p185 = por %p183, %p184
      %p186 = scmp.ne.s32.totalorder %s174, %s175
      %p187 = scmp.eq.s32.totalorder %s39, 1
      %p188 = por %p186, %p187
      %p190 = scmp.ne.s32.totalorder %s175, %s189
      %p191 = scmp.eq.s32.totalorder %s39, 0
      %p192 = por %p190, %p191
      %s194 = sadd.s32 %s193, 1
      %p197 = scmp.eq.s32.totalorder %s33, 1
      %p198 = scmp.ne.s32.totalorder %s193, %s195
      %p199 = scmp.eq.s32.totalorder %s33, 0
      %p200 = por %p198, %p199
      %p201 = scmp.ne.s32.totalorder %s193, %s195
      %p202 = scmp.eq.s32.totalorder %s38, 1
      %p203 = por %p201, %p202
      %p204 = scmp.ne.s32.totalorder %s195, %s196
      %p205 = scmp.eq.s32.totalorder %s38, 0
      %p206 = por %p204, %p205
      %p207 = scmp.ne.s32.totalorder %s195, %s196
      %p208 = scmp.eq.s32.totalorder %s39, 1
      %p209 = por %p207, %p208
      %p211 = scmp.ne.s32.totalorder %s196, %s210
      %p212 = scmp.eq.s32.totalorder %s39, 0
      %p213 = por %p211, %p212
      %s215 = sadd.s32 %s214, 1
      %p218 = scmp.eq.s32.totalorder %s33, 1
      %p219 = scmp.ne.s32.totalorder %s214, %s216
      %p220 = scmp.eq.s32.totalorder %s33, 0
      %p221 = por %p219, %p220
      %p222 = scmp.ne.s32.totalorder %s214, %s216
      %p223 = scmp.eq.s32.totalorder %s38, 1
      %p224 = por %p222, %p223
      %p225 = scmp.ne.s32.totalorder %s216, %s217
      %p226 = scmp.eq.s32.totalorder %s38, 0
      %p227 = por %p225, %p226
      %p228 = scmp.ne.s32.totalorder %s216, %s217
      %p229 = scmp.eq.s32.totalorder %s39, 1
      %p230 = por %p228, %p229
      %p232 = scmp.ne.s32.totalorder %s217, %s231
      %p233 = scmp.eq.s32.totalorder %s39, 0
      %p234 = por %p232, %p233
      %s236 = sadd.s32 %s235, 1
      %p239 = scmp.eq.s32.totalorder %s33, 1
      %p240 = scmp.ne.s32.totalorder %s235, %s237
      %p241 = scmp.eq.s32.totalorder %s33, 0
      %p242 = por %p240, %p241
      %p243 = scmp.ne.s32.totalorder %s235, %s237
      %p244 = scmp.eq.s32.totalorder %s38, 1
      %p245 = por %p243, %p244
      %p246 = scmp.ne.s32.totalorder %s237, %s238
      %p247 = scmp.eq.s32.totalorder %s38, 0
      %p248 = por %p246, %p247
      %p249 = scmp.ne.s32.totalorder %s237, %s238
      %p250 = scmp.eq.s32.totalorder %s39, 1
      %p251 = por %p249, %p250
      %p253 = scmp.ne.s32.totalorder %s238, %s252
      %p254 = scmp.eq.s32.totalorder %s39, 0
      %p255 = por %p253, %p254
      %s257 = sadd.s32 %s256, 1
      %p260 = scmp.eq.s32.totalorder %s33, 1
      %p261 = scmp.ne.s32.totalorder %s256, %s258
      %p262 = scmp.eq.s32.totalorder %s33, 0
      %p263 = por %p261, %p262
      %p264 = scmp.ne.s32.totalorder %s256, %s258
      %p265 = scmp.eq.s32.totalorder %s38, 1
      %p266 = por %p264, %p265
      %p267 = scmp.ne.s32.totalorder %s258, %s259
      %p268 = scmp.eq.s32.totalorder %s38, 0
      %p269 = por %p267, %p268
      %p270 = scmp.ne.s32.totalorder %s258, %s259
      %p271 = scmp.eq.s32.totalorder %s39, 1
      %p272 = por %p270, %p271
      %p274 = scmp.ne.s32.totalorder %s259, %s273
      %p275 = scmp.eq.s32.totalorder %s39, 0
      %p276 = por %p274, %p275
      %s278 = sadd.s32 %s277, 1
      %p281 = scmp.eq.s32.totalorder %s33, 1
      %p282 = scmp.ne.s32.totalorder %s277, %s279
      %p283 = scmp.eq.s32.totalorder %s33, 0
      %p284 = por %p282, %p283
      %p285 = scmp.ne.s32.totalorder %s277, %s279
      %p286 = scmp.eq.s32.totalorder %s38, 1
      %p287 = por %p285, %p286
      %p288 = scmp.ne.s32.totalorder %s279, %s280
      %p289 = scmp.eq.s32.totalorder %s38, 0
      %p290 = por %p288, %p289
      %p291 = scmp.ne.s32.totalorder %s279, %s280
      %p292 = scmp.eq.s32.totalorder %s39, 1
      %p293 = por %p291, %p292
      %p295 = scmp.ne.s32.totalorder %s280, %s294
      %p296 = scmp.eq.s32.totalorder %s39, 0
      %p297 = por %p295, %p296
      %s299 = sadd.s32 %s298, 1
      %p302 = scmp.eq.s32.totalorder %s33, 1
      %p303 = scmp.ne.s32.totalorder %s298, %s300
      %p304 = scmp.eq.s32.totalorder %s33, 0
      %p305 = por %p303, %p304
      %p306 = scmp.ne.s32.totalorder %s298, %s300
      %p307 = scmp.eq.s32.totalorder %s38, 1
      %p308 = por %p306, %p307
      %p309 = scmp.ne.s32.totalorder %s300, %s301
      %p310 = scmp.eq.s32.totalorder %s38, 0
      %p311 = por %p309, %p310
      %p312 = scmp.ne.s32.totalorder %s300, %s301
      %p313 = scmp.eq.s32.totalorder %s39, 1
      %p314 = por %p312, %p313
      %p316 = scmp.ne.s32.totalorder %s301, %s315
      %p317 = scmp.eq.s32.totalorder %s39, 0
      %p318 = por %p316, %p317
      %s320 = sadd.s32 %s319, 1
      %p323 = scmp.eq.s32.totalorder %s33, 1
      %p324 = scmp.ne.s32.totalorder %s319, %s321
      %p325 = scmp.eq.s32.totalorder %s33, 0
      %p326 = por %p324, %p325
      %p327 = scmp.ne.s32.totalorder %s319, %s321
      %p328 = scmp.eq.s32.totalorder %s38, 1
      %p329 = por %p327, %p328
      %p330 = scmp.ne.s32.totalorder %s321, %s322
      %p331 = scmp.eq.s32.totalorder %s38, 0
      %p332 = por %p330, %p331
      %p333 = scmp.ne.s32.totalorder %s321, %s322
      %p334 = scmp.eq.s32.totalorder %s39, 1
      %p335 = por %p333, %p334
      %p337 = scmp.ne.s32.totalorder %s322, %s336
      %p338 = scmp.eq.s32.totalorder %s39, 0
      %p339 = por %p337, %p338
      %s341 = sadd.s32 %s340, 1
      %p344 = scmp.eq.s32.totalorder %s33, 1
      %p345 = scmp.ne.s32.totalorder %s340, %s342
      %p346 = scmp.eq.s32.totalorder %s33, 0
      %p347 = por %p345, %p346
      %p348 = scmp.ne.s32.totalorder %s340, %s342
      %p349 = scmp.eq.s32.totalorder %s38, 1
      %p350 = por %p348, %p349
      %p351 = scmp.ne.s32.totalorder %s342, %s343
      %p352 = scmp.eq.s32.totalorder %s38, 0
      %p353 = por %p351, %p352
      %p354 = scmp.ne.s32.totalorder %s342, %s343
      %p355 = scmp.eq.s32.totalorder %s39, 1
      %p356 = por %p354, %p355
      %p358 = scmp.ne.s32.totalorder %s343, %s357
      %p359 = scmp.eq.s32.totalorder %s39, 0
      %p360 = por %p358, %p359
      %s362 = sadd.s32 %s361, 1
      %p365 = scmp.eq.s32.totalorder %s33, 1
      %p366 = scmp.ne.s32.totalorder %s361, %s363
      %p367 = scmp.eq.s32.totalorder %s33, 0
      %p368 = por %p366, %p367
      %p369 = scmp.ne.s32.totalorder %s361, %s363
      %p370 = scmp.eq.s32.totalorder %s38, 1
      %p371 = por %p369, %p370
      %p372 = scmp.ne.s32.totalorder %s363, %s364
      %p373 = scmp.eq.s32.totalorder %s38, 0
      %p374 = por %p372, %p373
      %p375 = scmp.ne.s32.totalorder %s363, %s364
      %p376 = scmp.eq.s32.totalorder %s39, 1
      %p377 = por %p375, %p376
      %p379 = scmp.ne.s32.totalorder %s364, %s378
      %p380 = scmp.eq.s32.totalorder %s39, 0
      %p381 = por %p379, %p380
      %s383 = sadd.s32 %s382, 1
      %p386 = scmp.eq.s32.totalorder %s33, 1
      %p387 = scmp.ne.s32.totalorder %s382, %s384
      %p388 = scmp.eq.s32.totalorder %s33, 0
      %p389 = por %p387, %p388
      %p390 = scmp.ne.s32.totalorder %s382, %s384
      %p391 = scmp.eq.s32.totalorder %s38, 1
      %p392 = por %p390, %p391
      %p393 = scmp.ne.s32.totalorder %s384, %s385
      %p394 = scmp.eq.s32.totalorder %s38, 0
      %p395 = por %p393, %p394
      %p396 = scmp.ne.s32.totalorder %s384, %s385
      %p397 = scmp.eq.s32.totalorder %s39, 1
      %p398 = por %p396, %p397
      %p400 = scmp.ne.s32.totalorder %s385, %s399
      %p401 = scmp.eq.s32.totalorder %s39, 0
      %p402 = por %p400, %p401
      %s403 = ssub.s32 %s33, %s40
      %p404 = scmp.eq.s32.totalorder %s403, 0
      %s406 = sadd.s32 %s405, 1
      %s407 = scalar_select %p404, %s405, %s406
      %p410 = pneg %p404
      %p411 = scmp.eq.s32.totalorder %s33, 1
      %p412 = por %p410, %p411
      %p413 = scmp.ne.s32.totalorder %s405, %s408
      %p414 = scmp.eq.s32.totalorder %s33, 0
      %p415 = por %p413, %p414
      %p416 = scmp.ne.s32.totalorder %s405, %s408
      %p417 = scmp.eq.s32.totalorder %s38, 1
      %p418 = por %p416, %p417
      %p419 = scmp.ne.s32.totalorder %s408, %s409
      %p420 = scmp.eq.s32.totalorder %s38, 0
      %p421 = por %p419, %p420
      %p422 = scmp.ne.s32.totalorder %s408, %s409
      %p423 = scmp.eq.s32.totalorder %s39, 1
      %p424 = por %p422, %p423
      %p426 = scmp.ne.s32.totalorder %s409, %s425
      %p427 = scmp.eq.s32.totalorder %s39, 0
      %p428 = por %p426, %p427
      %s429 = ssub.s32 %s33, %s40
      %p430 = scmp.eq.s32.totalorder %s429, 0
      %s432 = sadd.s32 %s431, 1
      %s433 = scalar_select %p430, %s431, %s432
      %p436 = pneg %p430
      %p437 = scmp.eq.s32.totalorder %s33, 1
      %p438 = por %p436, %p437
      %p439 = scmp.ne.s32.totalorder %s431, %s434
      %p440 = scmp.eq.s32.totalorder %s33, 0
      %p441 = por %p439, %p440
      %p442 = scmp.ne.s32.totalorder %s431, %s434
      %p443 = scmp.eq.s32.totalorder %s38, 1
      %p444 = por %p442, %p443
      %p445 = scmp.ne.s32.totalorder %s434, %s435
      %p446 = scmp.eq.s32.totalorder %s38, 0
      %p447 = por %p445, %p446
      %p448 = scmp.ne.s32.totalorder %s434, %s435
      %p449 = scmp.eq.s32.totalorder %s39, 1
      %p450 = por %p448, %p449
      %p452 = scmp.ne.s32.totalorder %s435, %s451
      %p453 = scmp.eq.s32.totalorder %s39, 0
      %p454 = por %p452, %p453
      %p455 = scmp.le.s32.totalorder 1, %s33
      %p456 = scmp.lt.s32.totalorder %s33, 3
      %p457 = pnand %p455, %p456
      %p458 = pneg %p457
      // Predicated region
      $region9: #{tpu_custom_call.1} parent=5 // pred_check
        _
      $region10: #{tpu_custom_call.1} parent=5 // pred_check_branch
        %460 = sbr.rel (%p457) target = $region12
      $region11: #{tpu_custom_call.1} parent=5 // pred_region
        %s461 = ssub.s32 %s33, 1
        // Predicated region
        $region13: #{tpu_custom_call.1} parent=11 // pred_check
          %p462 = pneg %p80
        $region14: #{tpu_custom_call.1} parent=11 // pred_check_branch
          %464 = sbr.rel (%p462) target = $region16
        $region15: #{tpu_custom_call.1} parent=11 // pred_region
          _
        $region16: #{tpu_custom_call.1} parent=11 // pred_fallthru
          _
        // Predicated region
        $region17: #{tpu_custom_call.1} parent=11 // pred_check
          %p465 = pneg %p101
        $region18: #{tpu_custom_call.1} parent=11 // pred_check_branch
          %467 = sbr.rel (%p465) target = $region20
        $region19: #{tpu_custom_call.1} parent=11 // pred_region
          _
        $region20: #{tpu_custom_call.1} parent=11 // pred_fallthru
          _
        // Predicated region
        $region21: #{tpu_custom_call.1} parent=11 // pred_check
          %p468 = pneg %p122
        $region22: #{tpu_custom_call.1} parent=11 // pred_check_branch
          %470 = sbr.rel (%p468) target = $region24
        $region23: #{tpu_custom_call.1} parent=11 // pred_region
          %472 = vsyncadd [#allocation4], 0
          %s473 = sshll.u32 %s3, 4
          %s474 = int_to_ptr.hbm [resolvable:$true] %s473
          %s475 = sshll.u32 [#allocation3], 4
          %s476 = int_to_ptr.vmem [resolvable:$true] %s475
          %481 = dma.hbm_to_vmem [thread:$0]  %s474, 512, %s476, [#allocation4], 128, 128, 8
        $region24: #{tpu_custom_call.1} parent=11 // pred_fallthru
          _
        // Predicated region
        $region25: #{tpu_custom_call.1} parent=11 // pred_check
          %p482 = pneg %p143
        $region26: #{tpu_custom_call.1} parent=11 // pred_check_branch
          %484 = sbr.rel (%p482) target = $region28
        $region27: #{tpu_custom_call.1} parent=11 // pred_region
          _
        $region28: #{tpu_custom_call.1} parent=11 // pred_fallthru
          _
        // Predicated region
        $region29: #{tpu_custom_call.1} parent=11 // pred_check
          %p485 = pneg %p164
        $region30: #{tpu_custom_call.1} parent=11 // pred_check_branch
          %487 = sbr.rel (%p485) target = $region32
        $region31: #{tpu_custom_call.1} parent=11 // pred_region
          _
        $region32: #{tpu_custom_call.1} parent=11 // pred_fallthru
          _
        // Predicated region
        $region33: #{tpu_custom_call.1} parent=11 // pred_check
          %p488 = pneg %p185
        $region34: #{tpu_custom_call.1} parent=11 // pred_check_branch
          %490 = sbr.rel (%p488) target = $region36
        $region35: #{tpu_custom_call.1} parent=11 // pred_region
          _
        $region36: #{tpu_custom_call.1} parent=11 // pred_fallthru
          _
        // Predicated region
        $region37: #{tpu_custom_call.1} parent=11 // pred_check
          %p491 = pneg %p206
        $region38: #{tpu_custom_call.1} parent=11 // pred_check_branch
          %493 = sbr.rel (%p491) target = $region40
        $region39: #{tpu_custom_call.1} parent=11 // pred_region
          %495 = vsyncadd [#allocation7], 0
          %s496 = sshll.u32 %s7, 4
          %s497 = int_to_ptr.hbm [resolvable:$true] %s496
          %s498 = sshll.u32 [#allocation6], 4
          %s499 = int_to_ptr.vmem [resolvable:$true] %s498
          %504 = dma.hbm_to_vmem [thread:$0]  %s497, 512, %s499, [#allocation7], 128, 128, 8
        $region40: #{tpu_custom_call.1} parent=11 // pred_fallthru
          _
        // Predicated region
        $region41: #{tpu_custom_call.1} parent=11 // pred_check
          %p505 = pneg %p227
        $region42: #{tpu_custom_call.1} parent=11 // pred_check_branch
          %507 = sbr.rel (%p505) target = $region44
        $region43: #{tpu_custom_call.1} parent=11 // pred_region
          _
        $region44: #{tpu_custom_call.1} parent=11 // pred_fallthru
          _
        // Predicated region
        $region45: #{tpu_custom_call.1} parent=11 // pred_check
          %p508 = pneg %p248
        $region46: #{tpu_custom_call.1} parent=11 // pred_check_branch
          %510 = sbr.rel (%p508) target = $region48
        $region47: #{tpu_custom_call.1} parent=11 // pred_region
          _
        $region48: #{tpu_custom_call.1} parent=11 // pred_fallthru
          _
        // Predicated region
        $region49: #{tpu_custom_call.1} parent=11 // pred_check
          %p511 = pneg %p269
        $region50: #{tpu_custom_call.1} parent=11 // pred_check_branch
          %513 = sbr.rel (%p511) target = $region52
        $region51: #{tpu_custom_call.1} parent=11 // pred_region
          _
        $region52: #{tpu_custom_call.1} parent=11 // pred_fallthru
          _
        // Predicated region
        $region53: #{tpu_custom_call.1} parent=11 // pred_check
          %p514 = pneg %p290
        $region54: #{tpu_custom_call.1} parent=11 // pred_check_branch
          %516 = sbr.rel (%p514) target = $region56
        $region55: #{tpu_custom_call.1} parent=11 // pred_region
          %518 = vsyncadd [#allocation7], 0
          %s519 = sshll.u32 %s11, 4
          %s520 = int_to_ptr.hbm [resolvable:$true] %s519
          %s521 = sshll.u32 [#allocation8], 4
          %s522 = int_to_ptr.vmem [resolvable:$true] %s521
          %527 = dma.hbm_to_vmem [thread:$0]  %s520, 512, %s522, [#allocation7], 128, 128, 8
        $region56: #{tpu_custom_call.1} parent=11 // pred_fallthru
          _
        // Predicated region
        $region57: #{tpu_custom_call.1} parent=11 // pred_check
          %p528 = pneg %p311
        $region58: #{tpu_custom_call.1} parent=11 // pred_check_branch
          %530 = sbr.rel (%p528) target = $region60
        $region59: #{tpu_custom_call.1} parent=11 // pred_region
          _
        $region60: #{tpu_custom_call.1} parent=11 // pred_fallthru
          _
        // Predicated region
        $region61: #{tpu_custom_call.1} parent=11 // pred_check
          %p531 = pneg %p332
        $region62: #{tpu_custom_call.1} parent=11 // pred_check_branch
          %533 = sbr.rel (%p531) target = $region64
        $region63: #{tpu_custom_call.1} parent=11 // pred_region
          _
        $region64: #{tpu_custom_call.1} parent=11 // pred_fallthru
          _
        // Predicated region
        $region65: #{tpu_custom_call.1} parent=11 // pred_check
          %p534 = pneg %p353
        $region66: #{tpu_custom_call.1} parent=11 // pred_check_branch
          %536 = sbr.rel (%p534) target = $region68
        $region67: #{tpu_custom_call.1} parent=11 // pred_region
          _
        $region68: #{tpu_custom_call.1} parent=11 // pred_fallthru
          _
        // Predicated region
        $region69: #{tpu_custom_call.1} parent=11 // pred_check
          %p537 = pneg %p374
        $region70: #{tpu_custom_call.1} parent=11 // pred_check_branch
          %539 = sbr.rel (%p537) target = $region72
        $region71: #{tpu_custom_call.1} parent=11 // pred_region
          _
        $region72: #{tpu_custom_call.1} parent=11 // pred_fallthru
          _
        // Predicated region
        $region73: #{tpu_custom_call.1} parent=11 // pred_check
          %p540 = pneg %p395
        $region74: #{tpu_custom_call.1} parent=11 // pred_check_branch
          %542 = sbr.rel (%p540) target = $region76
        $region75: #{tpu_custom_call.1} parent=11 // pred_region
          _
        $region76: #{tpu_custom_call.1} parent=11 // pred_fallthru
          _
      $region12: #{tpu_custom_call.1} parent=5 // pred_fallthru
        _
      %p543 = scmp.lt.s32.totalorder %s33, 2
      // Predicated region
      $region77: #{tpu_custom_call.1} parent=5 // pred_check
        %p544 = pneg %p543
      $region78: #{tpu_custom_call.1} parent=5 // pred_check_branch
        %546 = sbr.rel (%p544) target = $region80
      $region79: #{tpu_custom_call.1} parent=5 // pred_region
        // Predicated region
        $region81: #{tpu_custom_call.1} parent=79 // pred_check
          %p547 = pneg %p53
        $region82: #{tpu_custom_call.1} parent=79 // pred_check_branch
          %549 = sbr.rel (%p547) target = $region84
        $region83: #{tpu_custom_call.1} parent=79 // pred_region
          %p550 = scmp.lt.s32.totalorder %s33, 1
          %s551 = scalar_select %p550, %s33, 1
          %s552 = smul.addr %s551, 2
          %s553 = smul.addr %s552, 8
          %s554 = scalar_lea.vmem %s0, %s553
        $region84: #{tpu_custom_call.1} parent=79 // pred_fallthru
          _
      $region80: #{tpu_custom_call.1} parent=5 // pred_fallthru
        _
      %p555 = scmp.le.s32.totalorder 1, %s33
      %p556 = scmp.lt.s32.totalorder %s33, 3
      %p557 = pnand %p555, %p556
      %p558 = pneg %p557
      // Predicated region
      $region85: #{tpu_custom_call.1} parent=5 // pred_check
        _
      $region86: #{tpu_custom_call.1} parent=5 // pred_check_branch
        %560 = sbr.rel (%p557) target = $region88
      $region87: #{tpu_custom_call.1} parent=5 // pred_region
        %s561 = ssub.s32 %s33, 1
        // Predicated region
        $region89: #{tpu_custom_call.1} parent=87 // pred_check
          %p562 = pneg %p122
        $region90: #{tpu_custom_call.1} parent=87 // pred_check_branch
          %564 = sbr.rel (%p562) target = $region92
        $region91: #{tpu_custom_call.1} parent=87 // pred_region
          %566 = dma.done [#allocation4], 512
        $region92: #{tpu_custom_call.1} parent=87 // pred_fallthru
          _
        // Predicated region
        $region93: #{tpu_custom_call.1} parent=87 // pred_check
          %p567 = pneg %p206
        $region94: #{tpu_custom_call.1} parent=87 // pred_check_branch
          %569 = sbr.rel (%p567) target = $region96
        $region95: #{tpu_custom_call.1} parent=87 // pred_region
          %571 = dma.done [#allocation7], 512
        $region96: #{tpu_custom_call.1} parent=87 // pred_fallthru
          _
        // Predicated region
        $region97: #{tpu_custom_call.1} parent=87 // pred_check
          %p572 = pneg %p290
        $region98: #{tpu_custom_call.1} parent=87 // pred_check_branch
          %574 = sbr.rel (%p572) target = $region100
        $region99: #{tpu_custom_call.1} parent=87 // pred_region
          %576 = dma.done [#allocation7], 512
        $region100: #{tpu_custom_call.1} parent=87 // pred_fallthru
          _
        %p577 = scmp.lt.s32.totalorder %s38, 1
        %s578 = scalar_select %p577, %s38, 1
        %s579 = smul.addr %s578, 2
        %s580 = smul.addr %s579, 8
        %s581 = scalar_lea.vmem %s0, %s580
        %p582 = pneg %p59
        %p583 = pneg %p56
        %p584 = pneg %p80
        %p585 = pneg %p77
        %p586 = pneg %p101
        %p587 = pneg %p98
        %p588 = pneg %p122
        %p589 = pneg %p119
        %p590 = pneg %p143
        %p591 = pneg %p140
        %p592 = pneg %p164
        %p593 = pneg %p161
        %p594 = pneg %p185
        %p595 = pneg %p182
        %p596 = pneg %p206
        %p597 = pneg %p203
        %p598 = pneg %p227
        %p599 = pneg %p224
        %p600 = pneg %p248
        %p601 = pneg %p245
        %p602 = pneg %p269
        %p603 = pneg %p266
        %p604 = pneg %p290
        %p605 = pneg %p287
        %p606 = pneg %p311
        %p607 = pneg %p308
        %p608 = pneg %p332
        %p609 = pneg %p329
        %p610 = pneg %p353
        %p611 = pneg %p350
        %p612 = pneg %p374
        %p613 = pneg %p371
        %p614 = pneg %p395
        %p615 = pneg %p392
        %p616 = pneg %p421
        %p617 = pneg %p418
        %s618 = sand.u32 %s408, 1
        %s619 = scalar_lea.sflag [#allocation5], %s618
        %s620 = sand.u32 %s408, 1
        %s621 = smul.addr %s620, 16
        %s622 = scalar_lea.vmem [#allocation9], %s621
        %p623 = pneg %p447
        %p624 = pneg %p444
        %s625 = sand.u32 %s434, 1
        %s626 = scalar_lea.sflag [#allocation11], %s625
        %s627 = sand.u32 %s434, 1
        %s628 = smul.addr %s627, 16
        %s629 = scalar_lea.vmem [#allocation10], %s628
        %p630 = scmp.lt.s32.totalorder %s38, 1
        %s631 = scalar_select %p630, %s38, 1
        %s632 = smul.addr %s631, 2
        %s633 = smul.addr %s632, 8
        %s634 = scalar_lea.vmem %s0, %s633
        %v635 = vld [vmem:[%s634] sm:$0xff]
        %v636 = vld [vmem:[%s634 + $0x8] sm:$0xff]
        %v637 = vld [vmem:[%s1] sm:$0xff]
        %v638 = vld [vmem:[%s1 + $0x8] sm:$0xff]
        %v639 = vld [vmem:[%s1 + $0x10] sm:$0xff]
        %v640 = vld [vmem:[%s1 + $0x18] sm:$0xff]
        %v641 = vld [vmem:[%s4] sm:$0x1]
        %v643 = vperm.slane %v641, 0
        %vm645 = vcmask 261120
        %v647 = vsel %vm645, %v635, 0
        %v650 = vsel %vm645, %v636, 0
        %652 = vmatpush.msra.mxu0 0.0
        %653 = vmatpush.msra.mxu0 0.0
        %654 = vmatpush.msra.mxu0 0.0
        %655 = vmatpush.msra.mxu0 0.0
        %656 = vmatpush.msra.mxu0 0.0
        %657 = vmatpush.msra.mxu0 0.0
        %658 = vmatpush.msra.mxu0 0.0
        %659 = vmatpush.msra.mxu0 0.0
        %660 = vmatpush.msra.mxu0 0.0
        %661 = vmatpush.msra.mxu0 0.0
        %662 = vmatpush.msra.mxu0 0.0
        %663 = vmatpush.msra.mxu0 0.0
        %664 = vmatpush.msra.mxu0 %v640
        %665 = vmatpush.msra.mxu0 %v639
        %666 = vmatpush.msra.mxu0 %v638
        %667 = vmatpush.msra.mxu0 %v637
        %668 = vmatmul.f32.gmra.mxu0 %v647
        %v669 = vpop.f32.mrf.mxu0
        %v670 = vadd.f32 %v643, %v669
        %671 = vmatmul.f32.gmra.mxu0 %v650
        %v672 = vpop.f32.mrf.mxu0
        %v673 = vadd.f32 %v643, %v672
        %674 = vdwg.mxu0
        %v675 = vld [vmem:[%s2] sm:$0xff]
        %v676 = vld [vmem:[%s2 + $0x8] sm:$0xff]
        %v677 = vld [vmem:[%s2 + $0x10] sm:$0xff]
        %v678 = vld [vmem:[%s2 + $0x18] sm:$0xff]
        %v679 = vld [vmem:[%s5] sm:$0x1]
        %v681 = vperm.slane %v679, 0
        %683 = vmatpush.msra.mxu0 0.0
        %684 = vmatpush.msra.mxu0 0.0
        %685 = vmatpush.msra.mxu0 0.0
        %686 = vmatpush.msra.mxu0 0.0
        %687 = vmatpush.msra.mxu0 0.0
        %688 = vmatpush.msra.mxu0 0.0
        %689 = vmatpush.msra.mxu0 0.0
        %690 = vmatpush.msra.mxu0 0.0
        %691 = vmatpush.msra.mxu0 0.0
        %692 = vmatpush.msra.mxu0 0.0
        %693 = vmatpush.msra.mxu0 0.0
        %694 = vmatpush.msra.mxu0 0.0
        %695 = vmatpush.msra.mxu0 %v678
        %696 = vmatpush.msra.mxu0 %v677
        %697 = vmatpush.msra.mxu0 %v676
        %698 = vmatpush.msra.mxu0 %v675
        %699 = vmatmul.f32.gmra.mxu0 %v647
        %v700 = vpop.f32.mrf.mxu0
        %v701 = vadd.f32 %v681, %v700
        %702 = vmatmul.f32.gmra.mxu0 %v650
        %v703 = vpop.f32.mrf.mxu0
        %v704 = vadd.f32 %v681, %v703
        %705 = vdwg.mxu0
        %v706 = vld [vmem:[#allocation3] sm:$0xff]
        %v707 = vld [vmem:[#allocation3 + $0x8] sm:$0xff]
        %v708 = vld [vmem:[#allocation3 + $0x10] sm:$0xff]
        %v709 = vld [vmem:[#allocation3 + $0x18] sm:$0xff]
        %v710 = vld [vmem:[%s6] sm:$0x1]
        %v712 = vperm.slane %v710, 0
        %714 = vmatpush.msra.mxu0 0.0
        %715 = vmatpush.msra.mxu0 0.0
        %716 = vmatpush.msra.mxu0 0.0
        %717 = vmatpush.msra.mxu0 0.0
        %718 = vmatpush.msra.mxu0 0.0
        %719 = vmatpush.msra.mxu0 0.0
        %720 = vmatpush.msra.mxu0 0.0
        %721 = vmatpush.msra.mxu0 0.0
        %722 = vmatpush.msra.mxu0 0.0
        %723 = vmatpush.msra.mxu0 0.0
        %724 = vmatpush.msra.mxu0 0.0
        %725 = vmatpush.msra.mxu0 0.0
        %726 = vmatpush.msra.mxu0 %v709
        %727 = vmatpush.msra.mxu0 %v708
        %728 = vmatpush.msra.mxu0 %v707
        %729 = vmatpush.msra.mxu0 %v706
        %730 = vmatmul.f32.gmra.mxu0 %v647
        %v731 = vpop.f32.mrf.mxu0
        %v732 = vadd.f32 %v712, %v731
        %733 = vmatmul.f32.gmra.mxu0 %v650
        %v734 = vpop.f32.mrf.mxu0
        %v735 = vadd.f32 %v712, %v734
        %736 = vdwg.mxu0
        %vm737 = vcmask 64512
        %v739 = vsel %vm737, %v670, 0
        %v742 = vsel %vm737, %v673, 0
        %v745 = vsel %vm737, %v701, 0
        %v748 = vsel %vm737, %v704, 0
        %750 = vmatpush.xpose.msra.mxu0 0.0
        %751 = vmatpush.xpose.msra.mxu0 0.0
        %752 = vmatpush.xpose.msra.mxu0 0.0
        %753 = vmatpush.xpose.msra.mxu0 0.0
        %754 = vmatpush.xpose.msra.mxu0 0.0
        %755 = vmatpush.xpose.msra.mxu0 0.0
        %756 = vmatpush.xpose.msra.mxu0 0.0
        %757 = vmatpush.xpose.msra.mxu0 0.0
        %758 = vmatpush.xpose.msra.mxu0 0.0
        %759 = vmatpush.xpose.msra.mxu0 0.0
        %760 = vmatpush.xpose.msra.mxu0 0.0
        %761 = vmatpush.xpose.msra.mxu0 0.0
        %762 = vmatpush.xpose.msra.mxu0 0.0
        %763 = vmatpush.xpose.msra.mxu0 0.0
        %764 = vmatpush.xpose.msra.mxu0 %v748
        %765 = vmatpush.xpose.msra.mxu0 %v745
        %766 = vmatmul.f32.gmra.mxu0 %v739
        %v767 = vpop.f32.mrf.mxu0
        %v768 = vadd.f32 0.0, %v767
        %769 = vmatmul.f32.gmra.mxu0 %v742
        %v770 = vpop.f32.mrf.mxu0
        %v771 = vadd.f32 0.0, %v770
        %772 = vdwg.mxu0
        %vm773 = vcmask 130048
        %v774 = vsel %vm773, %v768, -inf
        %775 = vmax.xlane.f32.xlu0 %v774
        %v776 = vpop.xlane.xlu0 %775
        %v777 = vsel %vm773, %v771, -inf
        %778 = vmax.xlane.f32.xlu0 %v777
        %v779 = vpop.xlane.xlu0 %778
        %v780 = vsub.f32 %v768, %v776
        %v781 = vsub.f32 %v771, %v779
        %v782 = vmul.f32 %v780, 1.442695
        %v783 = vpow.pop %v782
        %v784 = vmul.f32 %v781, 1.442695
        %v785 = vpow.pop %v784
        %v786 = vsel %vm773, %v783, 0.0
        %787 = vadd.xlane.f32.xlu0 %v786
        %v788 = vpop.xlane.xlu0 %787
        %v789 = vsel %vm773, %v785, 0.0
        %790 = vadd.xlane.f32.xlu0 %v789
        %v791 = vpop.xlane.xlu0 %790
        %v792 = vrcp.pop %v788
        %v793 = vrcp.pop %v791
        %v794 = vmul.f32 %v783, %v792
        %v795 = vmul.f32 %v785, %v793
        %v797 = vsel %vm773, %v794, 0
        %v800 = vsel %vm773, %v795, 0
        %802 = vmatpush.msra.mxu0 0.0
        %803 = vmatpush.msra.mxu0 0.0
        %804 = vmatpush.msra.mxu0 0.0
        %805 = vmatpush.msra.mxu0 0.0
        %806 = vmatpush.msra.mxu0 0.0
        %807 = vmatpush.msra.mxu0 0.0
        %808 = vmatpush.msra.mxu0 0.0
        %809 = vmatpush.msra.mxu0 0.0
        %810 = vmatpush.msra.mxu0 0.0
        %811 = vmatpush.msra.mxu0 0.0
        %812 = vmatpush.msra.mxu0 0.0
        %813 = vmatpush.msra.mxu0 0.0
        %814 = vmatpush.msra.mxu0 0.0
        %815 = vmatpush.msra.mxu0 0.0
        %816 = vmatpush.msra.mxu0 %v735
        %817 = vmatpush.msra.mxu0 %v732
        %818 = vmatmul.f32.gmra.mxu0 %v797
        %v819 = vpop.f32.mrf.mxu0
        %v820 = vadd.f32 0.0, %v819
        %821 = vmatmul.f32.gmra.mxu0 %v800
        %v822 = vpop.f32.mrf.mxu0
        %v823 = vadd.f32 0.0, %v822
        %824 = vdwg.mxu0
        %825 = vst.msk [vmem:[#allocation2] sm:$0xff] %vm737, %v820
        %826 = vst.msk [vmem:[#allocation2 + $0x8] sm:$0xff] %vm737, %v823
        %827 = vst.msk [vmem:[%s629] sm:$0xff] %vm773, %v794
        %828 = vst.msk [vmem:[%s629 + $0x8] sm:$0xff] %vm773, %v795
        %829 = vrot.lane.b32.xlu0 %v670, 120
        %v830 = vpop.permute.xlu0 %829
        %831 = vrot.lane.b32.xlu0 %v673, 120
        %v832 = vpop.permute.xlu0 %831
        %833 = vrot.lane.b32.xlu0 %v701, 120
        %v834 = vpop.permute.xlu0 %833
        %835 = vrot.lane.b32.xlu0 %v704, 120
        %v836 = vpop.permute.xlu0 %835
        %v837 = vsel %vm737, %v830, 0
        %v839 = vsel %vm737, %v832, 0
        %v841 = vsel %vm737, %v834, 0
        %v843 = vsel %vm737, %v836, 0
        %845 = vmatpush.xpose.msra.mxu0 0.0
        %846 = vmatpush.xpose.msra.mxu0 0.0
        %847 = vmatpush.xpose.msra.mxu0 0.0
        %848 = vmatpush.xpose.msra.mxu0 0.0
        %849 = vmatpush.xpose.msra.mxu0 0.0
        %850 = vmatpush.xpose.msra.mxu0 0.0
        %851 = vmatpush.xpose.msra.mxu0 0.0
        %852 = vmatpush.xpose.msra.mxu0 0.0
        %853 = vmatpush.xpose.msra.mxu0 0.0
        %854 = vmatpush.xpose.msra.mxu0 0.0
        %855 = vmatpush.xpose.msra.mxu0 0.0
        %856 = vmatpush.xpose.msra.mxu0 0.0
        %857 = vmatpush.xpose.msra.mxu0 0.0
        %858 = vmatpush.xpose.msra.mxu0 0.0
        %859 = vmatpush.xpose.msra.mxu0 %v843
        %860 = vmatpush.xpose.msra.mxu0 %v841
        %861 = vmatmul.f32.gmra.mxu0 %v837
        %v862 = vpop.f32.mrf.mxu0
        %v863 = vadd.f32 0.0, %v862
        %864 = vmatmul.f32.gmra.mxu0 %v839
        %v865 = vpop.f32.mrf.mxu0
        %v866 = vadd.f32 0.0, %v865
        %867 = vdwg.mxu0
        %v868 = vsel %vm773, %v863, -inf
        %869 = vmax.xlane.f32.xlu0 %v868
        %v870 = vpop.xlane.xlu0 %869
        %v871 = vsel %vm773, %v866, -inf
        %872 = vmax.xlane.f32.xlu0 %v871
        %v873 = vpop.xlane.xlu0 %872
        %v874 = vsub.f32 %v863, %v870
        %v875 = vsub.f32 %v866, %v873
        %v876 = vmul.f32 %v874, 1.442695
        %v877 = vpow.pop %v876
        %v878 = vmul.f32 %v875, 1.442695
        %v879 = vpow.pop %v878
        %v880 = vsel %vm773, %v877, 0.0
        %881 = vadd.xlane.f32.xlu0 %v880
        %v882 = vpop.xlane.xlu0 %881
        %v883 = vsel %vm773, %v879, 0.0
        %884 = vadd.xlane.f32.xlu0 %v883
        %v885 = vpop.xlane.xlu0 %884
        %v886 = vrcp.pop %v882
        %v887 = vrcp.pop %v885
        %v888 = vmul.f32 %v877, %v886
        %v889 = vmul.f32 %v879, %v887
        %892 = vrot.lane.b32.xlu0 %v732, 120
        %v893 = vpop.permute.xlu0 %892
        %894 = vrot.lane.b32.xlu0 %v735, 120
        %v895 = vpop.permute.xlu0 %894
        %v899 = vsel %vm773, %v888, 0
        %v902 = vsel %vm773, %v889, 0
        %904 = vmatpush.msra.mxu0 0.0
        %905 = vmatpush.msra.mxu0 0.0
        %906 = vmatpush.msra.mxu0 0.0
        %907 = vmatpush.msra.mxu0 0.0
        %908 = vmatpush.msra.mxu0 0.0
        %909 = vmatpush.msra.mxu0 0.0
        %910 = vmatpush.msra.mxu0 0.0
        %911 = vmatpush.msra.mxu0 0.0
        %912 = vmatpush.msra.mxu0 0.0
        %913 = vmatpush.msra.mxu0 0.0
        %914 = vmatpush.msra.mxu0 0.0
        %915 = vmatpush.msra.mxu0 0.0
        %916 = vmatpush.msra.mxu0 0.0
        %917 = vmatpush.msra.mxu0 0.0
        %918 = vmatpush.msra.mxu0 %v895
        %919 = vmatpush.msra.mxu0 %v893
        %920 = vmatmul.f32.gmra.mxu0 %v899
        %v921 = vpop.f32.mrf.mxu0
        %v922 = vadd.f32 0.0, %v921
        %923 = vmatmul.f32.gmra.mxu0 %v902
        %v924 = vpop.f32.mrf.mxu0
        %v925 = vadd.f32 0.0, %v924
        %926 = vdwg.mxu0
        %929 = vrot.lane.b32.xlu0 %v922, 8
        %v930 = vpop.permute.xlu0 %929
        %931 = vrot.lane.b32.xlu0 %v925, 8
        %v932 = vpop.permute.xlu0 %931
        %vm935 = vcmask 130112
        %936 = vst.msk [vmem:[#allocation2] sm:$0xff] %vm935, %v930
        %937 = vst.msk [vmem:[#allocation2 + $0x8] sm:$0xff] %vm935, %v932
        %v938 = vld [vmem:[%s629] sm:$0xff]
        %v939 = vld [vmem:[%s629 + $0x8] sm:$0xff]
        %v940 = vadd.f32 %v938, %v888
        %v941 = vadd.f32 %v939, %v889
        %942 = vst.msk [vmem:[%s629] sm:$0xff] %vm773, %v940
        %943 = vst.msk [vmem:[%s629 + $0x8] sm:$0xff] %vm773, %v941
        %944 = vrot.lane.b32.xlu0 %v670, 112
        %v945 = vpop.permute.xlu0 %944
        %946 = vrot.lane.b32.xlu0 %v673, 112
        %v947 = vpop.permute.xlu0 %946
        %948 = vrot.lane.b32.xlu0 %v701, 112
        %v949 = vpop.permute.xlu0 %948
        %950 = vrot.lane.b32.xlu0 %v704, 112
        %v951 = vpop.permute.xlu0 %950
        %v952 = vsel %vm737, %v945, 0
        %v954 = vsel %vm737, %v947, 0
        %v956 = vsel %vm737, %v949, 0
        %v958 = vsel %vm737, %v951, 0
        %960 = vmatpush.xpose.msra.mxu0 0.0
        %961 = vmatpush.xpose.msra.mxu0 0.0
        %962 = vmatpush.xpose.msra.mxu0 0.0
        %963 = vmatpush.xpose.msra.mxu0 0.0
        %964 = vmatpush.xpose.msra.mxu0 0.0
        %965 = vmatpush.xpose.msra.mxu0 0.0
        %966 = vmatpush.xpose.msra.mxu0 0.0
        %967 = vmatpush.xpose.msra.mxu0 0.0
        %968 = vmatpush.xpose.msra.mxu0 0.0
        %969 = vmatpush.xpose.msra.mxu0 0.0
        %970 = vmatpush.xpose.msra.mxu0 0.0
        %971 = vmatpush.xpose.msra.mxu0 0.0
        %972 = vmatpush.xpose.msra.mxu0 0.0
        %973 = vmatpush.xpose.msra.mxu0 0.0
        %974 = vmatpush.xpose.msra.mxu0 %v958
        %975 = vmatpush.xpose.msra.mxu0 %v956
        %976 = vmatmul.f32.gmra.mxu0 %v952
        %v977 = vpop.f32.mrf.mxu0
        %v978 = vadd.f32 0.0, %v977
        %979 = vmatmul.f32.gmra.mxu0 %v954
        %v980 = vpop.f32.mrf.mxu0
        %v981 = vadd.f32 0.0, %v980
        %982 = vdwg.mxu0
        %v983 = vsel %vm773, %v978, -inf
        %984 = vmax.xlane.f32.xlu0 %v983
        %v985 = vpop.xlane.xlu0 %984
        %v986 = vsel %vm773, %v981, -inf
        %987 = vmax.xlane.f32.xlu0 %v986
        %v988 = vpop.xlane.xlu0 %987
        %v989 = vsub.f32 %v978, %v985
        %v990 = vsub.f32 %v981, %v988
        %v991 = vmul.f32 %v989, 1.442695
        %v992 = vpow.pop %v991
        %v993 = vmul.f32 %v990, 1.442695
        %v994 = vpow.pop %v993
        %v995 = vsel %vm773, %v992, 0.0
        %996 = vadd.xlane.f32.xlu0 %v995
        %v997 = vpop.xlane.xlu0 %996
        %v998 = vsel %vm773, %v994, 0.0
        %999 = vadd.xlane.f32.xlu0 %v998
        %v1000 = vpop.xlane.xlu0 %999
        %v1001 = vrcp.pop %v997
        %v1002 = vrcp.pop %v1000
        %v1003 = vmul.f32 %v992, %v1001
        %v1004 = vmul.f32 %v994, %v1002
        %1005 = vrot.lane.b32.xlu0 %v732, 112
        %v1006 = vpop.permute.xlu0 %1005
        %1007 = vrot.lane.b32.xlu0 %v735, 112
        %v1008 = vpop.permute.xlu0 %1007
        %v1012 = vsel %vm773, %v1003, 0
        %v1015 = vsel %vm773, %v1004, 0
        %1017 = vmatpush.msra.mxu0 0.0
        %1018 = vmatpush.msra.mxu0 0.0
        %1019 = vmatpush.msra.mxu0 0.0
        %1020 = vmatpush.msra.mxu0 0.0
        %1021 = vmatpush.msra.mxu0 0.0
        %1022 = vmatpush.msra.mxu0 0.0
        %1023 = vmatpush.msra.mxu0 0.0
        %1024 = vmatpush.msra.mxu0 0.0
        %1025 = vmatpush.msra.mxu0 0.0
        %1026 = vmatpush.msra.mxu0 0.0
        %1027 = vmatpush.msra.mxu0 0.0
        %1028 = vmatpush.msra.mxu0 0.0
        %1029 = vmatpush.msra.mxu0 0.0
        %1030 = vmatpush.msra.mxu0 0.0
        %1031 = vmatpush.msra.mxu0 %v1008
        %1032 = vmatpush.msra.mxu0 %v1006
        %1033 = vmatmul.f32.gmra.mxu0 %v1012
        %v1034 = vpop.f32.mrf.mxu0
        %v1035 = vadd.f32 0.0, %v1034
        %1036 = vmatmul.f32.gmra.mxu0 %v1015
        %v1037 = vpop.f32.mrf.mxu0
        %v1038 = vadd.f32 0.0, %v1037
        %1039 = vdwg.mxu0
        %1042 = vrot.lane.b32.xlu0 %v1035, 16
        %v1043 = vpop.permute.xlu0 %1042
        %1044 = vrot.lane.b32.xlu0 %v1038, 16
        %v1045 = vpop.permute.xlu0 %1044
        %vm1048 = vcmask 195712
        %1049 = vst.msk [vmem:[#allocation2] sm:$0xff] %vm1048, %v1043
        %1050 = vst.msk [vmem:[#allocation2 + $0x8] sm:$0xff] %vm1048, %v1045
        %v1051 = vld [vmem:[%s629] sm:$0xff]
        %v1052 = vld [vmem:[%s629 + $0x8] sm:$0xff]
        %v1053 = vadd.f32 %v1051, %v1003
        %v1054 = vadd.f32 %v1052, %v1004
        %1055 = vst.msk [vmem:[%s629] sm:$0xff] %vm773, %v1053
        %1056 = vst.msk [vmem:[%s629 + $0x8] sm:$0xff] %vm773, %v1054
        %1057 = vrot.lane.b32.xlu0 %v670, 104
        %v1058 = vpop.permute.xlu0 %1057
        %1059 = vrot.lane.b32.xlu0 %v673, 104
        %v1060 = vpop.permute.xlu0 %1059
        %1061 = vrot.lane.b32.xlu0 %v701, 104
        %v1062 = vpop.permute.xlu0 %1061
        %1063 = vrot.lane.b32.xlu0 %v704, 104
        %v1064 = vpop.permute.xlu0 %1063
        %v1065 = vsel %vm737, %v1058, 0
        %v1067 = vsel %vm737, %v1060, 0
        %v1069 = vsel %vm737, %v1062, 0
        %v1071 = vsel %vm737, %v1064, 0
        %1073 = vmatpush.xpose.msra.mxu0 0.0
        %1074 = vmatpush.xpose.msra.mxu0 0.0
        %1075 = vmatpush.xpose.msra.mxu0 0.0
        %1076 = vmatpush.xpose.msra.mxu0 0.0
        %1077 = vmatpush.xpose.msra.mxu0 0.0
        %1078 = vmatpush.xpose.msra.mxu0 0.0
        %1079 = vmatpush.xpose.msra.mxu0 0.0
        %1080 = vmatpush.xpose.msra.mxu0 0.0
        %1081 = vmatpush.xpose.msra.mxu0 0.0
        %1082 = vmatpush.xpose.msra.mxu0 0.0
        %1083 = vmatpush.xpose.msra.mxu0 0.0
        %1084 = vmatpush.xpose.msra.mxu0 0.0
        %1085 = vmatpush.xpose.msra.mxu0 0.0
        %1086 = vmatpush.xpose.msra.mxu0 0.0
        %1087 = vmatpush.xpose.msra.mxu0 %v1071
        %1088 = vmatpush.xpose.msra.mxu0 %v1069
        %1089 = vmatmul.f32.gmra.mxu0 %v1065
        %v1090 = vpop.f32.mrf.mxu0
        %v1091 = vadd.f32 0.0, %v1090
        %1092 = vmatmul.f32.gmra.mxu0 %v1067
        %v1093 = vpop.f32.mrf.mxu0
        %v1094 = vadd.f32 0.0, %v1093
        %1095 = vdwg.mxu0
        %v1096 = vsel %vm773, %v1091, -inf
        %1097 = vmax.xlane.f32.xlu0 %v1096
        %v1098 = vpop.xlane.xlu0 %1097
        %v1099 = vsel %vm773, %v1094, -inf
        %1100 = vmax.xlane.f32.xlu0 %v1099
        %v1101 = vpop.xlane.xlu0 %1100
        %v1102 = vsub.f32 %v1091, %v1098
        %v1103 = vsub.f32 %v1094, %v1101
        %v1104 = vmul.f32 %v1102, 1.442695
        %v1105 = vpow.pop %v1104
        %v1106 = vmul.f32 %v1103, 1.442695
        %v1107 = vpow.pop %v1106
        %v1108 = vsel %vm773, %v1105, 0.0
        %1109 = vadd.xlane.f32.xlu0 %v1108
        %v1110 = vpop.xlane.xlu0 %1109
        %v1111 = vsel %vm773, %v1107, 0.0
        %1112 = vadd.xlane.f32.xlu0 %v1111
        %v1113 = vpop.xlane.xlu0 %1112
        %v1114 = vrcp.pop %v1110
        %v1115 = vrcp.pop %v1113
        %v1116 = vmul.f32 %v1105, %v1114
        %v1117 = vmul.f32 %v1107, %v1115
        %1118 = vrot.lane.b32.xlu0 %v732, 104
        %v1119 = vpop.permute.xlu0 %1118
        %1120 = vrot.lane.b32.xlu0 %v735, 104
        %v1121 = vpop.permute.xlu0 %1120
        %v1125 = vsel %vm773, %v1116, 0
        %v1128 = vsel %vm773, %v1117, 0
        %1130 = vmatpush.msra.mxu0 0.0
        %1131 = vmatpush.msra.mxu0 0.0
        %1132 = vmatpush.msra.mxu0 0.0
        %1133 = vmatpush.msra.mxu0 0.0
        %1134 = vmatpush.msra.mxu0 0.0
        %1135 = vmatpush.msra.mxu0 0.0
        %1136 = vmatpush.msra.mxu0 0.0
        %1137 = vmatpush.msra.mxu0 0.0
        %1138 = vmatpush.msra.mxu0 0.0
        %1139 = vmatpush.msra.mxu0 0.0
        %1140 = vmatpush.msra.mxu0 0.0
        %1141 = vmatpush.msra.mxu0 0.0
        %1142 = vmatpush.msra.mxu0 0.0
        %1143 = vmatpush.msra.mxu0 0.0
        %1144 = vmatpush.msra.mxu0 %v1121
        %1145 = vmatpush.msra.mxu0 %v1119
        %1146 = vmatmul.f32.gmra.mxu0 %v1125
        %v1147 = vpop.f32.mrf.mxu0
        %v1148 = vadd.f32 0.0, %v1147
        %1149 = vmatmul.f32.gmra.mxu0 %v1128
        %v1150 = vpop.f32.mrf.mxu0
        %v1151 = vadd.f32 0.0, %v1150
        %1152 = vdwg.mxu0
        %1155 = vrot.lane.b32.xlu0 %v1148, 24
        %v1156 = vpop.permute.xlu0 %1155
        %1157 = vrot.lane.b32.xlu0 %v1151, 24
        %v1158 = vpop.permute.xlu0 %1157
        %vm1161 = vcmask 261312
        %1162 = vst.msk [vmem:[#allocation2] sm:$0xff] %vm1161, %v1156
        %1163 = vst.msk [vmem:[#allocation2 + $0x8] sm:$0xff] %vm1161, %v1158
        %v1164 = vld [vmem:[%s629] sm:$0xff]
        %v1165 = vld [vmem:[%s629 + $0x8] sm:$0xff]
        %v1166 = vadd.f32 %v1164, %v1116
        %v1167 = vadd.f32 %v1165, %v1117
        %1168 = vst.msk [vmem:[%s629] sm:$0xff] %vm773, %v1166
        %1169 = vst.msk [vmem:[%s629 + $0x8] sm:$0xff] %vm773, %v1167
        %v1170 = vld [vmem:[%s629] sm:$0xff]
        %v1171 = vld [vmem:[%s629 + $0x8] sm:$0xff]
        %v1172 = vmul.f32 %v1170, 0.25
        %v1173 = vmul.f32 %v1171, 0.25
        %1174 = vst.msk [vmem:[%s629] sm:$0xff] %vm773, %v1172
        %1175 = vst.msk [vmem:[%s629 + $0x8] sm:$0xff] %vm773, %v1173
        %v1176 = vld [vmem:[#allocation2] sm:$0xff]
        %v1177 = vld [vmem:[#allocation2 + $0x8] sm:$0xff]
        %v1178 = vld [vmem:[#allocation6] sm:$0xff]
        %v1179 = vld [vmem:[#allocation6 + $0x8] sm:$0xff]
        %v1180 = vld [vmem:[#allocation6 + $0x10] sm:$0xff]
        %v1181 = vld [vmem:[#allocation6 + $0x18] sm:$0xff]
        %v1182 = vld [vmem:[%s8] sm:$0x1]
        %v1184 = vperm.slane %v1182, 0
        %v1187 = vsel %vm645, %v1176, 0
        %v1190 = vsel %vm645, %v1177, 0
        %1192 = vmatpush.msra.mxu0 0.0
        %1193 = vmatpush.msra.mxu0 0.0
        %1194 = vmatpush.msra.mxu0 0.0
        %1195 = vmatpush.msra.mxu0 0.0
        %1196 = vmatpush.msra.mxu0 0.0
        %1197 = vmatpush.msra.mxu0 0.0
        %1198 = vmatpush.msra.mxu0 0.0
        %1199 = vmatpush.msra.mxu0 0.0
        %1200 = vmatpush.msra.mxu0 0.0
        %1201 = vmatpush.msra.mxu0 0.0
        %1202 = vmatpush.msra.mxu0 0.0
        %1203 = vmatpush.msra.mxu0 0.0
        %1204 = vmatpush.msra.mxu0 %v1181
        %1205 = vmatpush.msra.mxu0 %v1180
        %1206 = vmatpush.msra.mxu0 %v1179
        %1207 = vmatpush.msra.mxu0 %v1178
        %1208 = vmatmul.f32.gmra.mxu0 %v1187
        %v1209 = vpop.f32.mrf.mxu0
        %v1210 = vadd.f32 %v1184, %v1209
        %1211 = vmatmul.f32.gmra.mxu0 %v1190
        %v1212 = vpop.f32.mrf.mxu0
        %v1213 = vadd.f32 %v1184, %v1212
        %1214 = vdwg.mxu0
        %v1215 = vadd.f32 %v635, %v1210
        %v1216 = vadd.f32 %v636, %v1213
        %v1217 = vld [vmem:[%s9] sm:$0x1]
        %v1218 = vld [vmem:[%s10] sm:$0x1]
        %v1219 = vsel %vm645, %v1215, 0.0
        %1220 = vadd.xlane.f32.xlu0 %v1219
        %v1221 = vpop.xlane.xlu0 %1220
        %v1222 = vsel %vm645, %v1216, 0.0
        %1223 = vadd.xlane.f32.xlu0 %v1222
        %v1224 = vpop.xlane.xlu0 %1223
        %v1225 = vrcp.pop 32.0
        %v1226 = vmul.f32 32.0, %v1225
        %v1227 = vsub.f32 1.0, %v1226
        %v1228 = vmul.f32 %v1225, %v1227
        %v1229 = vadd.f32 %v1225, %v1228
        %vm1230 = vweird.f32 %v1225
        %v1231 = vsel %vm1230, %v1225, %v1229
        %v1232 = vmul.f32 %v1221, %v1231
        %v1233 = vmul.f32 %v1224, %v1231
        %v1234 = vsub.f32 %v1215, %v1232
        %v1235 = vsub.f32 %v1216, %v1233
        %v1236 = vmul.f32 %v1234, %v1234
        %v1237 = vmul.f32 %v1235, %v1235
        %v1238 = vsel %vm645, %v1236, 0.0
        %1239 = vadd.xlane.f32.xlu0 %v1238
        %v1240 = vpop.xlane.xlu0 %1239
        %v1241 = vsel %vm645, %v1237, 0.0
        %1242 = vadd.xlane.f32.xlu0 %v1241
        %v1243 = vpop.xlane.xlu0 %1242
        %v1244 = vmul.f32 %v1240, %v1231
        %v1245 = vmul.f32 %v1243, %v1231
        %v1246 = vadd.f32 %v1244, 1e-06
        %v1247 = vadd.f32 %v1245, 1e-06
        %v1248 = vrsqrt.pop %v1246
        %v1249 = vmul.f32 %v1248, %v1246
        %v1250 = vmul.f32 %v1249, %v1248
        %v1251 = vmul.f32 0.5, %v1250
        %v1252 = vsub.f32 1.5, %v1251
        %v1253 = vmul.f32 %v1248, %v1252
        %vm1254 = vweird.f32 %v1246
        %vm1255 = vweird.f32 %v1248
        %vm1256 = vmor %vm1254, %vm1255
        %v1257 = vsel %vm1256, %v1248, %v1253
        %v1258 = vrsqrt.pop %v1247
        %v1259 = vmul.f32 %v1258, %v1247
        %v1260 = vmul.f32 %v1259, %v1258
        %v1261 = vmul.f32 0.5, %v1260
        %v1262 = vsub.f32 1.5, %v1261
        %v1263 = vmul.f32 %v1258, %v1262
        %vm1264 = vweird.f32 %v1247
        %vm1265 = vweird.f32 %v1258
        %vm1266 = vmor %vm1264, %vm1265
        %v1267 = vsel %vm1266, %v1258, %v1263
        %v1268 = vmul.f32 %v1234, %v1257
        %v1269 = vmul.f32 %v1235, %v1267
        %v1271 = vperm.slane %v1217, 0
        %v1273 = vmul.f32 %v1268, %v1271
        %v1274 = vmul.f32 %v1269, %v1271
        %v1276 = vperm.slane %v1218, 0
        %v1278 = vadd.f32 %v1273, %v1276
        %v1279 = vadd.f32 %v1274, %v1276
        %v1280 = vld [vmem:[#allocation8] sm:$0xff]
        %v1281 = vld [vmem:[#allocation8 + $0x8] sm:$0xff]
        %v1282 = vld [vmem:[#allocation8 + $0x10] sm:$0xff]
        %v1283 = vld [vmem:[#allocation8 + $0x18] sm:$0xff]
        %v1284 = vld [vmem:[%s12] sm:$0x1]
        %v1286 = vperm.slane %v1284, 0
        %v1289 = vsel %vm645, %v1278, 0
        %v1292 = vsel %vm645, %v1279, 0
        %1294 = vmatpush.msra.mxu0 0.0
        %1295 = vmatpush.msra.mxu0 0.0
        %1296 = vmatpush.msra.mxu0 0.0
        %1297 = vmatpush.msra.mxu0 0.0
        %1298 = vmatpush.msra.mxu0 0.0
        %1299 = vmatpush.msra.mxu0 0.0
        %1300 = vmatpush.msra.mxu0 0.0
        %1301 = vmatpush.msra.mxu0 0.0
        %1302 = vmatpush.msra.mxu0 0.0
        %1303 = vmatpush.msra.mxu0 0.0
        %1304 = vmatpush.msra.mxu0 0.0
        %1305 = vmatpush.msra.mxu0 0.0
        %1306 = vmatpush.msra.mxu0 %v1283
        %1307 = vmatpush.msra.mxu0 %v1282
        %1308 = vmatpush.msra.mxu0 %v1281
        %1309 = vmatpush.msra.mxu0 %v1280
        %1310 = vmatmul.f32.gmra.mxu0 %v1289
        %v1311 = vpop.f32.mrf.mxu0
        %v1312 = vadd.f32 %v1286, %v1311
        %1313 = vmatmul.f32.gmra.mxu0 %v1292
        %v1314 = vpop.f32.mrf.mxu0
        %v1315 = vadd.f32 %v1286, %v1314
        %1316 = vdwg.mxu0
        %v1317 = vmax.f32 %v1312, 0.0
        %v1318 = vmax.f32 %v1315, 0.0
        %v1319 = vld [vmem:[%s13] sm:$0xff]
        %v1320 = vld [vmem:[%s13 + $0x8] sm:$0xff]
        %v1321 = vld [vmem:[%s13 + $0x10] sm:$0xff]
        %v1322 = vld [vmem:[%s13 + $0x18] sm:$0xff]
        %v1323 = vld [vmem:[%s13 + $0x20] sm:$0xff]
        %v1324 = vld [vmem:[%s13 + $0x28] sm:$0xff]
        %v1325 = vld [vmem:[%s13 + $0x30] sm:$0xff]
        %v1326 = vld [vmem:[%s13 + $0x38] sm:$0xff]
        %v1327 = vld [vmem:[%s14] sm:$0x1]
        %v1329 = vperm.slane %v1327, 0
        %vm1331 = vcmask 523264
        %v1333 = vsel %vm1331, %v1317, 0
        %v1336 = vsel %vm1331, %v1318, 0
        %1338 = vmatpush.msra.mxu0 0.0
        %1339 = vmatpush.msra.mxu0 0.0
        %1340 = vmatpush.msra.mxu0 0.0
        %1341 = vmatpush.msra.mxu0 0.0
        %1342 = vmatpush.msra.mxu0 0.0
        %1343 = vmatpush.msra.mxu0 0.0
        %1344 = vmatpush.msra.mxu0 0.0
        %1345 = vmatpush.msra.mxu0 0.0
        %1346 = vmatpush.msra.mxu0 %v1326
        %1347 = vmatpush.msra.mxu0 %v1325
        %1348 = vmatpush.msra.mxu0 %v1324
        %1349 = vmatpush.msra.mxu0 %v1323
        %1350 = vmatpush.msra.mxu0 %v1322
        %1351 = vmatpush.msra.mxu0 %v1321
        %1352 = vmatpush.msra.mxu0 %v1320
        %1353 = vmatpush.msra.mxu0 %v1319
        %1354 = vmatmul.f32.gmra.mxu0 %v1333
        %v1355 = vpop.f32.mrf.mxu0
        %v1356 = vadd.f32 %v1329, %v1355
        %1357 = vmatmul.f32.gmra.mxu0 %v1336
        %v1358 = vpop.f32.mrf.mxu0
        %v1359 = vadd.f32 %v1329, %v1358
        %1360 = vdwg.mxu0
        %v1361 = vadd.f32 %v1278, %v1356
        %v1362 = vadd.f32 %v1279, %v1359
        %v1363 = vld [vmem:[%s15] sm:$0x1]
        %v1364 = vld [vmem:[%s16] sm:$0x1]
        %v1365 = vsel %vm645, %v1361, 0.0
        %1366 = vadd.xlane.f32.xlu0 %v1365
        %v1367 = vpop.xlane.xlu0 %1366
        %v1368 = vsel %vm645, %v1362, 0.0
        %1369 = vadd.xlane.f32.xlu0 %v1368
        %v1370 = vpop.xlane.xlu0 %1369
        %v1371 = vmul.f32 %v1367, %v1231
        %v1372 = vmul.f32 %v1370, %v1231
        %v1373 = vsub.f32 %v1361, %v1371
        %v1374 = vsub.f32 %v1362, %v1372
        %v1375 = vmul.f32 %v1373, %v1373
        %v1376 = vmul.f32 %v1374, %v1374
        %v1377 = vsel %vm645, %v1375, 0.0
        %1378 = vadd.xlane.f32.xlu0 %v1377
        %v1379 = vpop.xlane.xlu0 %1378
        %v1380 = vsel %vm645, %v1376, 0.0
        %1381 = vadd.xlane.f32.xlu0 %v1380
        %v1382 = vpop.xlane.xlu0 %1381
        %v1383 = vmul.f32 %v1379, %v1231
        %v1384 = vmul.f32 %v1382, %v1231
        %v1385 = vadd.f32 %v1383, 1e-06
        %v1386 = vadd.f32 %v1384, 1e-06
        %v1387 = vrsqrt.pop %v1385
        %v1388 = vmul.f32 %v1387, %v1385
        %v1389 = vmul.f32 %v1388, %v1387
        %v1390 = vmul.f32 0.5, %v1389
        %v1391 = vsub.f32 1.5, %v1390
        %v1392 = vmul.f32 %v1387, %v1391
        %vm1393 = vweird.f32 %v1385
        %vm1394 = vweird.f32 %v1387
        %vm1395 = vmor %vm1393, %vm1394
        %v1396 = vsel %vm1395, %v1387, %v1392
        %v1397 = vrsqrt.pop %v1386
        %v1398 = vmul.f32 %v1397, %v1386
        %v1399 = vmul.f32 %v1398, %v1397
        %v1400 = vmul.f32 0.5, %v1399
        %v1401 = vsub.f32 1.5, %v1400
        %v1402 = vmul.f32 %v1397, %v1401
        %vm1403 = vweird.f32 %v1386
        %vm1404 = vweird.f32 %v1397
        %vm1405 = vmor %vm1403, %vm1404
        %v1406 = vsel %vm1405, %v1397, %v1402
        %v1407 = vmul.f32 %v1373, %v1396
        %v1408 = vmul.f32 %v1374, %v1406
        %v1410 = vperm.slane %v1363, 0
        %v1412 = vmul.f32 %v1407, %v1410
        %v1413 = vmul.f32 %v1408, %v1410
        %v1415 = vperm.slane %v1364, 0
        %v1417 = vadd.f32 %v1412, %v1415
        %v1418 = vadd.f32 %v1413, %v1415
        %1419 = vst.msk [vmem:[%s622] sm:$0xff] %vm645, %v1417
        %1420 = vst.msk [vmem:[%s622 + $0x8] sm:$0xff] %vm645, %v1418
        %s1421 = sand.u32 %s408, 1
        %s1422 = scalar_lea.sflag [#allocation5], %s1421
        %s1423 = sand.u32 %s408, 1
        %s1424 = smul.addr %s1423, 16
        %s1425 = scalar_lea.vmem [#allocation9], %s1424
        %s1426 = sand.u32 %s434, 1
        %s1427 = scalar_lea.sflag [#allocation11], %s1426
        %s1428 = sand.u32 %s434, 1
        %s1429 = smul.addr %s1428, 16
        %s1430 = scalar_lea.vmem [#allocation10], %s1429
        // Predicated region
        $region101: #{tpu_custom_call.1} parent=87 // pred_check
          %p1431 = pneg %p418
        $region102: #{tpu_custom_call.1} parent=87 // pred_check_branch
          %1433 = sbr.rel (%p1431) target = $region104
        $region103: #{tpu_custom_call.1} parent=87 // pred_region
          %1435 = vsyncadd %s1422, 0
          %s1436 = smul.addr %s38, 2
          %s1437 = smul.addr %s1436, 8
          %s1438 = scalar_lea.hbm %s17, %s1437
          %s1439 = sshll.u32 %s1425, 4
          %s1440 = int_to_ptr.vmem [resolvable:$true] %s1439
          %s1441 = sshll.u32 %s1438, 4
          %s1442 = int_to_ptr.hbm [resolvable:$true] %s1441
          %1447 = dma.vmem_to_hbm [thread:$0]  %s1440, 256, %s1442, %s1422, 128, 128, 8
        $region104: #{tpu_custom_call.1} parent=87 // pred_fallthru
          _
        // Predicated region
        $region105: #{tpu_custom_call.1} parent=87 // pred_check
          %p1448 = pneg %p444
        $region106: #{tpu_custom_call.1} parent=87 // pred_check_branch
          %1450 = sbr.rel (%p1448) target = $region108
        $region107: #{tpu_custom_call.1} parent=87 // pred_region
          %1452 = vsyncadd %s1427, 0
          %s1453 = smul.addr %s38, 2
          %s1454 = smul.addr %s1453, 8
          %s1455 = scalar_lea.hbm %s18, %s1454
          %s1456 = sshll.u32 %s1430, 4
          %s1457 = int_to_ptr.vmem [resolvable:$true] %s1456
          %s1458 = sshll.u32 %s1455, 4
          %s1459 = int_to_ptr.hbm [resolvable:$true] %s1458
          %1464 = dma.vmem_to_hbm [thread:$0]  %s1457, 256, %s1459, %s1427, 128, 128, 8
        $region108: #{tpu_custom_call.1} parent=87 // pred_fallthru
          _
      $region88: #{tpu_custom_call.1} parent=5 // pred_fallthru
        _
      %p1465 = scmp.le.s32.totalorder 2, %s33
      // Predicated region
      $region109: #{tpu_custom_call.1} parent=5 // pred_check
        %p1466 = pneg %p1465
      $region110: #{tpu_custom_call.1} parent=5 // pred_check_branch
        %1468 = sbr.rel (%p1466) target = $region112
      $region111: #{tpu_custom_call.1} parent=5 // pred_region
        %s1469 = ssub.s32 %s33, 2
        // Predicated region
        $region113: #{tpu_custom_call.1} parent=111 // pred_check
          %p1470 = pneg %p424
        $region114: #{tpu_custom_call.1} parent=111 // pred_check_branch
          %1472 = sbr.rel (%p1470) target = $region116
        $region115: #{tpu_custom_call.1} parent=111 // pred_region
          %s1473 = sand.u32 %s409, 1
          %s1474 = scalar_lea.sflag [#allocation5], %s1473
          %s1475 = sand.u32 %s409, 1
          %s1476 = smul.addr %s1475, 16
          %s1477 = scalar_lea.vmem [#allocation9], %s1476
          %1479 = dma.done %s1474, 256
        $region116: #{tpu_custom_call.1} parent=111 // pred_fallthru
          _
        // Predicated region
        $region117: #{tpu_custom_call.1} parent=111 // pred_check
          %p1480 = pneg %p450
        $region118: #{tpu_custom_call.1} parent=111 // pred_check_branch
          %1482 = sbr.rel (%p1480) target = $region120
        $region119: #{tpu_custom_call.1} parent=111 // pred_region
          %s1483 = sand.u32 %s435, 1
          %s1484 = scalar_lea.sflag [#allocation11], %s1483
          %s1485 = sand.u32 %s435, 1
          %s1486 = smul.addr %s1485, 16
          %s1487 = scalar_lea.vmem [#allocation10], %s1486
          %1489 = dma.done %s1484, 256
        $region120: #{tpu_custom_call.1} parent=111 // pred_fallthru
          _
      $region112: #{tpu_custom_call.1} parent=5 // pred_fallthru
        _
    $region6: #{tpu_custom_call.1} parent=1 // loop_footer
      %s37 = sadd.s32 1, %s33
    $region7: #{tpu_custom_call.1} parent=1 // loop_footer_branch
      %32 = sbr.rel target = $region3
    $region8: #{tpu_custom_call.1} parent=1 // loop_exit
      _
    %1490 = vsyncpa [#allocation4], 1
    %s1491 = scalar_lea.sflag [#allocation4], 1
    %1492 = vsyncpa %s1491, 1
    %1493 = vsyncpa [#allocation7], 1
    %1494 = vsyncpa [#allocation5], 1
    %s1495 = scalar_lea.sflag [#allocation5], 1
    %1496 = vsyncpa %s1495, 1
    %1497 = vsyncpa [#allocation11], 1
    %s1498 = scalar_lea.sflag [#allocation11], 1
    %1499 = vsyncpa %s1498, 1

</llo_original>
